<compile_context>
chip_gen: v5e
topology: v5e:2x2
jax: 0.10.0
libtpu: 0.0.40
codegen_flags: <defaults>
</compile_context>

<pallas_src>
import sys

import jax
import jax.numpy as jnp
from jax import lax
from jax.experimental import pallas as pl
from jax.experimental.pallas import tpu as pltpu

LN_EPS = 1e-5

# Contract the channel axis of the activation tile with axis 0 of the weight.
_DN_RANK3 = (((2,), (0,)), ((), ()))   # (tr, W2, 2C) x (2C, D) -> (tr, W2, D)
_DN_RANK2 = (((1,), (0,)), ((), ()))   # (M, 2C)     x (2C, D) -> (M, D)

_CompilerParams = getattr(pltpu, "CompilerParams", None)
if _CompilerParams is None:  # very old Pallas naming
    _CompilerParams = getattr(pltpu, "TPUCompilerParams")


def _round_up(n, m):
    return ((n + m - 1) // m) * m


def _layernorm(y, g, b, out_dtype):
    """LayerNorm over the last axis of f32 `y`; g/b are f32 (1, D)."""
    d = y.shape[-1]
    s1 = jnp.sum(y, axis=-1, keepdims=True)
    s2 = jnp.sum(y * y, axis=-1, keepdims=True)
    mean = s1 * (1.0 / d)
    var = s2 * (1.0 / d) - mean * mean
    var = jnp.maximum(var, 0.0)            # guard E[y^2]-E[y]^2 cancellation
    y_hat = (y - mean) * lax.rsqrt(var + LN_EPS)
    return (y_hat * g + b).astype(out_dtype)


def _kernel_rank3(xe_ref, xo_ref, we_ref, wo_ref, g_ref, b_ref, o_ref):
    """Preferred body: rank-3 dot_general, no in-kernel flatten/relayout."""
    y = lax.dot_general(xe_ref[...], we_ref[...], _DN_RANK3,
                        preferred_element_type=jnp.float32)
    y = y + lax.dot_general(xo_ref[...], wo_ref[...], _DN_RANK3,
                            preferred_element_type=jnp.float32)
    o_ref[...] = _layernorm(y, g_ref[...], b_ref[...], o_ref.dtype)


def _kernel_flatten(xe_ref, xo_ref, we_ref, wo_ref, g_ref, b_ref, o_ref):
    """Fallback body (identical HBM traffic): flatten to 2-D matmuls."""
    tr, w2, c2 = xe_ref.shape
    xe = xe_ref[...].reshape(tr * w2, c2)
    xo = xo_ref[...].reshape(tr * w2, c2)
    y = lax.dot_general(xe, we_ref[...], _DN_RANK2,
                        preferred_element_type=jnp.float32)
    y = y + lax.dot_general(xo, wo_ref[...], _DN_RANK2,
                            preferred_element_type=jnp.float32)
    out = _layernorm(y, g_ref[...], b_ref[...], o_ref.dtype)
    o_ref[...] = out.reshape(tr, w2, out.shape[-1])


def _invariant_spec(shape, single_buffer):
    """BlockSpec for a grid-invariant operand (same block every step)."""
    index_map = lambda i, _n=len(shape): (0,) * _n
    if single_buffer and hasattr(pl, "Buffered"):
        try:
            return pl.BlockSpec(shape, index_map, pipeline_mode=pl.Buffered(1))
        except TypeError:
            pass
    return pl.BlockSpec(shape, index_map)


def _plan_tiles(bh2, w2, c, itemsize):
    """Byte-budgeted row-pair tile + VMEM limit (padding-aware)."""
    d = 2 * c                                   # output channels == slab channels
    sub = max(8, 32 // itemsize)                # sublanes: f32 -> 8, bf16 -> 16
    w2p = _round_up(w2, sub)                    # trailing (W2, D) tile pads W2 ...
    dp = _round_up(d, 128)                      # ... and channels up to lane width

    vmem_cap = None
    try:
        vmem_cap = int(pltpu.get_tpu_info().vmem_capacity_bytes)
    except Exception:                           # heuristic only; stay conservative
        vmem_cap = None
    small_vmem = vmem_cap is None or vmem_cap <= 96 * 2**20   # v7x-class / unknown

    # HBM-bandwidth-bound kernel: amortize the ~0.35us per-step cost with
    # multi-MiB input tiles (target bytes, not a fixed row count).
    target_in_bytes = (5 if small_vmem else 12) * 2**20
    per_rp_in = 2 * w2p * dp * itemsize         # even + odd slab per row-pair
    tr = max(1, target_in_bytes // per_rp_in)

    # v7x has 2 TensorCores: keep >= 4 steps (>= 2 per core, pipelined) when
    # there is enough work; single-TC parts only need >= 2 steps.
    min_steps = 4 if small_vmem else 2
    tr = int(min(tr, max(1, -(-bh2 // min_steps)), bh2))

    cap = min(int(0.75 * (vmem_cap if vmem_cap else 64 * 2**20)), 100 * 2**20)
    w_bytes = 2 * _round_up(d, sub) * dp * itemsize      # W_e + W_o blocks
    gb_bytes = 2 * sub * dp * 4                          # f32 gamma/beta blocks
    while True:
        blk = tr * w2p * dp
        in_blk = 2 * blk * itemsize             # even + odd activation block
        out_blk = blk * itemsize
        f32_tmp = 3 * blk * 4                   # f32 accumulator + LN temporaries
        # double-buffered activations + (conservatively double) params + temps
        need = 2 * (in_blk + out_blk) + 2 * (w_bytes + gb_bytes) + f32_tmp
        if need <= cap or tr <= 8:
            break
        tr = max(8, tr // 2)
    tr = max(1, min(tr, bh2))
    vmem_limit = int(min(cap, max(32 * 2**20, need + need // 4)))
    return tr, vmem_limit


def patch_merging_pallas(x, w, gamma, beta, input_resolution, *, interpret=False):
    """x: (B, H*W, C) -> (B, H*W//4, 2C), matching PatchMerging.forward.

    `w` is the nn.Linear(4C, 2C, bias=False) weight stored as (4C, 2C) so that
    the reduction is `x4 @ w`; gamma/beta are the LayerNorm(2C) parameters.
    """
    H, W = input_resolution
    B, L, C = x.shape
    assert L == H * W, "input feature has wrong size"
    assert H % 2 == 0 and W % 2 == 0, f"x size ({H}*{W}) are not even."
    H2, W2 = H // 2, W // 2
    C2 = 2 * C                      # channels per even/odd half-patch slab
    D = 2 * C                       # output channels of the reduction
    bh2 = B * H2                    # number of pixel-row pairs
    dtype = x.dtype
    itemsize = jnp.dtype(dtype).itemsize

    # Keep matmul operands in the model dtype (bf16 stays bf16 -> native MXU).
    w = w.astype(dtype)
    # torch.cat order is [x0, x1, x2, x3]; the even pixel row carries [x0 | x2]
    # and the odd pixel row carries [x1 | x3], so split the (4C, D) weight into
    # the matching halves.
    w4 = w.reshape(4, C, D)
    we = jnp.concatenate([w4[0], w4[2]], axis=0)    # (2C, D)
    wo = jnp.concatenate([w4[1], w4[3]], axis=0)    # (2C, D)
    g2 = gamma.reshape(1, D).astype(jnp.float32)
    b2 = beta.reshape(1, D).astype(jnp.float32)

    # Pure, zero-copy reshape: (B, H*W, C) -> (B*H/2, 2, W/2, 2C).
    # dim1 = even/odd pixel row; last dim = [even-col C | odd-col C].
    x4d = x.reshape(bh2, 2, W2, C2)

    tr, vmem_limit = _plan_tiles(bh2, W2, C, itemsize)
    grid = (pl.cdiv(bh2, tr),)

    def build_call(kernel_body, single_buffer):
        act_even = pl.BlockSpec((tr, None, W2, C2), lambda i: (i, 0, 0, 0))
        act_odd = pl.BlockSpec((tr, None, W2, C2), lambda i: (i, 1, 0, 0))
        param_specs = [
            _invariant_spec((C2, D), single_buffer),   # W_e
            _invariant_spec((C2, D), single_buffer),   # W_o
            _invariant_spec((1, D), single_buffer),    # gamma (f32)
            _invariant_spec((1, D), single_buffer),    # beta  (f32)
        ]
        out_spec = pl.BlockSpec((tr, W2, D), lambda i: (i, 0, 0))
        return pl.pallas_call(
            kernel_body,
            grid=grid,
            in_specs=[act_even, act_odd] + param_specs,
            out_specs=out_spec,
            out_shape=jax.ShapeDtypeStruct((bh2, W2, D), dtype),
            compiler_params=_CompilerParams(
                dimension_semantics=("parallel",),
                vmem_limit_bytes=vmem_limit,
            ),
            interpret=interpret,
        )

    # Narrow, loud fallback chain: every variant is fully fused (identical HBM
    # traffic); only the in-kernel codegen differs.  Failures are reported on
    # stderr and the last error is re-raised if no variant lowers.
    attempts = (
        ("rank3-dot / single-buffered params", _kernel_rank3, True),
        ("rank3-dot", _kernel_rank3, False),
        ("in-kernel flatten", _kernel_flatten, False),
    )
    out3d, last_err = None, None
    for name, body, single_buf in attempts:
        try:
            out3d = build_call(body, single_buf)(x4d, x4d, we, wo, g2, b2)
            break
        except Exception as e:                      # lowering / compile failure
            last_err = e
            msg = str(e).splitlines()[0][:300] if str(e) else type(e).__name__
            print(f"[patch_merging_pallas] WARNING: variant '{name}' failed "
                  f"({type(e).__name__}: {msg}); trying next fused variant.",
                  file=sys.stderr)
    if out3d is None:
        raise last_err

    # Free reshape: (B*H2, W2, D) -> (B, H2*W2, D); matches torch's patch order.
    return out3d.reshape(B, H2 * W2, D)


def reference_jax(x, w, gamma, beta, input_resolution):
    """Pure-JAX reference mirroring the PyTorch PatchMerging.forward."""
    H, W = input_resolution
    B, L, C = x.shape
    xg = x.reshape(B, H, W, C)
    x0 = xg[:, 0::2, 0::2, :]
    x1 = xg[:, 1::2, 0::2, :]
    x2 = xg[:, 0::2, 1::2, :]
    x3 = xg[:, 1::2, 1::2, :]
    x4 = jnp.concatenate([x0, x1, x2, x3], axis=-1).reshape(B, -1, 4 * C)
    y = jnp.einsum("blk,kd->bld", x4, w, precision=lax.Precision.HIGHEST)
    mean = jnp.mean(y, axis=-1, keepdims=True)
    var = jnp.mean((y - mean) ** 2, axis=-1, keepdims=True)
    return (y - mean) * lax.rsqrt(var + LN_EPS) * gamma + beta


if __name__ == "__main__":
    # Small shapes consistent with the module: B=2, H=W=16, C=32.
    B, H, W, C = 2, 16, 16, 32
    key = jax.random.PRNGKey(0)
    kx, kw = jax.random.split(key)

    x = jax.random.normal(kx, (B, H * W, C), dtype=jnp.float32)

    # nn.Linear(4C, 2C, bias=False) weight stored transposed for x @ w,
    # uniform(-1/sqrt(4C), 1/sqrt(4C)); LayerNorm(2C) gamma/beta defaults.
    bound = 1.0 / (4 * C) ** 0.5
    w = jax.random.uniform(kw, (4 * C, 2 * C), dtype=jnp.float32,
                           minval=-bound, maxval=bound)
    gamma = jnp.ones((2 * C,), dtype=jnp.float32)
    beta = jnp.zeros((2 * C,), dtype=jnp.float32)

    out = patch_merging_pallas(x, w, gamma, beta, (H, W))
    out = jax.block_until_ready(out)

    ref = reference_jax(x, w, gamma, beta, (H, W))
    assert out.shape == (B, (H // 2) * (W // 2), 2 * C), out.shape
    max_err = float(jnp.max(jnp.abs(out - ref)))
    # Tolerance covers TPU MXU matmul rounding vs the HIGHEST-precision
    # reference; structural errors would show up as O(1) differences.
    assert max_err < 2e-2, f"mismatch vs reference: max abs err {max_err}"

    print("KERNEL_OK")
</pallas_src>

<mosaic_0001>
module attributes {stable_mosaic.version = 11 : i64} {
  func.func @_kernel_rank3(%arg0: i32, %arg1: memref<4x1x8x64xf32, #tpu.memory_space<vmem>>, %arg2: memref<4x1x8x64xf32, #tpu.memory_space<vmem>>, %arg3: memref<64x64xf32, #tpu.memory_space<vmem>>, %arg4: memref<64x64xf32, #tpu.memory_space<vmem>>, %arg5: memref<1x64xf32, #tpu.memory_space<vmem>>, %arg6: memref<1x64xf32, #tpu.memory_space<vmem>>, %arg7: memref<4x8x64xf32, #tpu.memory_space<vmem>>) attributes {dimension_semantics = [#tpu.dimension_semantics<parallel>], iteration_bounds = array<i64: 4>, scalar_prefetch = 0 : i64, scratch_operands = 0 : i64, tpu.core_type = #tpu.core_type<tc>, window_params = [{transform_indices = @transform_0, window_bounds = array<i64: 4, 1, 8, 64>}, {transform_indices = @transform_1, window_bounds = array<i64: 4, 1, 8, 64>}, {pipeline_mode = #tpu.pipeline_mode<synchronous>, transform_indices = @transform_2, window_bounds = array<i64: 64, 64>}, {pipeline_mode = #tpu.pipeline_mode<synchronous>, transform_indices = @transform_3, window_bounds = array<i64: 64, 64>}, {pipeline_mode = #tpu.pipeline_mode<synchronous>, transform_indices = @transform_4, window_bounds = array<i64: 1, 64>}, {pipeline_mode = #tpu.pipeline_mode<synchronous>, transform_indices = @transform_5, window_bounds = array<i64: 1, 64>}, {transform_indices = @transform_6, window_bounds = array<i64: 4, 8, 64>}]} {
    %c0 = arith.constant 0 : index
    %c0_0 = arith.constant 0 : index
    %c0_1 = arith.constant 0 : index
    %c0_2 = arith.constant 0 : index
    %0 = vector.load %arg1[%c0, %c0_0, %c0_1, %c0_2] : memref<4x1x8x64xf32, #tpu.memory_space<vmem>>, vector<4x1x8x64xf32>
    %1 = vector.shape_cast %0 : vector<4x1x8x64xf32> to vector<4x8x64xf32>
    %c0_3 = arith.constant 0 : index
    %c0_4 = arith.constant 0 : index
    %2 = vector.load %arg3[%c0_3, %c0_4] : memref<64x64xf32, #tpu.memory_space<vmem>>, vector<64x64xf32>
    %cst = arith.constant dense<0.000000e+00> : vector<4x8x64xf32>
    %3 = tpu.matmul %1, %2, %cst {dimension_numbers = #tpu.dot_dimension_numbers<[2], [0], [0, 1], [1], [0, 0, 0, 1, 1, 1], [], []>} : vector<4x8x64xf32>, vector<64x64xf32>, vector<4x8x64xf32> -> vector<4x8x64xf32>
    %c0_5 = arith.constant 0 : index
    %c0_6 = arith.constant 0 : index
    %c0_7 = arith.constant 0 : index
    %c0_8 = arith.constant 0 : index
    %4 = vector.load %arg2[%c0_5, %c0_6, %c0_7, %c0_8] : memref<4x1x8x64xf32, #tpu.memory_space<vmem>>, vector<4x1x8x64xf32>
    %5 = vector.shape_cast %4 : vector<4x1x8x64xf32> to vector<4x8x64xf32>
    %c0_9 = arith.constant 0 : index
    %c0_10 = arith.constant 0 : index
    %6 = vector.load %arg4[%c0_9, %c0_10] : memref<64x64xf32, #tpu.memory_space<vmem>>, vector<64x64xf32>
    %cst_11 = arith.constant dense<0.000000e+00> : vector<4x8x64xf32>
    %7 = tpu.matmul %5, %6, %cst_11 {dimension_numbers = #tpu.dot_dimension_numbers<[2], [0], [0, 1], [1], [0, 0, 0, 1, 1, 1], [], []>} : vector<4x8x64xf32>, vector<64x64xf32>, vector<4x8x64xf32> -> vector<4x8x64xf32>
    %8 = arith.addf %3, %7 : vector<4x8x64xf32>
    %c0_12 = arith.constant 0 : index
    %c0_13 = arith.constant 0 : index
    %9 = vector.load %arg5[%c0_12, %c0_13] : memref<1x64xf32, #tpu.memory_space<vmem>>, vector<1x64xf32>
    %c0_14 = arith.constant 0 : index
    %c0_15 = arith.constant 0 : index
    %10 = vector.load %arg6[%c0_14, %c0_15] : memref<1x64xf32, #tpu.memory_space<vmem>>, vector<1x64xf32>
    %cst_16 = arith.constant dense<0.000000e+00> : vector<4x8xf32>
    %11 = vector.multi_reduction <add>, %8, %cst_16 [2] : vector<4x8x64xf32> to vector<4x8xf32>
    %12 = vector.shape_cast %11 : vector<4x8xf32> to vector<4x8x1xf32>
    %13 = arith.mulf %8, %8 : vector<4x8x64xf32>
    %cst_17 = arith.constant dense<0.000000e+00> : vector<4x8xf32>
    %14 = vector.multi_reduction <add>, %13, %cst_17 [2] : vector<4x8x64xf32> to vector<4x8xf32>
    %15 = vector.shape_cast %14 : vector<4x8xf32> to vector<4x8x1xf32>
    %cst_18 = arith.constant 1.562500e-02 : f32
    %16 = vector.broadcast %cst_18 : f32 to vector<4x8x1xf32>
    %17 = arith.mulf %12, %16 : vector<4x8x1xf32>
    %cst_19 = arith.constant 1.562500e-02 : f32
    %18 = vector.broadcast %cst_19 : f32 to vector<4x8x1xf32>
    %19 = arith.mulf %15, %18 : vector<4x8x1xf32>
    %20 = arith.mulf %17, %17 : vector<4x8x1xf32>
    %21 = arith.subf %19, %20 : vector<4x8x1xf32>
    %cst_20 = arith.constant 0.000000e+00 : f32
    %22 = vector.broadcast %cst_20 : f32 to vector<4x8x1xf32>
    %23 = arith.maximumf %21, %22 : vector<4x8x1xf32>
    %24 = vector.broadcast %17 : vector<4x8x1xf32> to vector<4x8x64xf32>
    %25 = arith.subf %8, %24 : vector<4x8x64xf32>
    %cst_21 = arith.constant 9.99999974E-6 : f32
    %26 = vector.broadcast %cst_21 : f32 to vector<4x8x1xf32>
    %27 = arith.addf %23, %26 : vector<4x8x1xf32>
    %28 = math.rsqrt %27 : vector<4x8x1xf32>
    %29 = vector.broadcast %28 : vector<4x8x1xf32> to vector<4x8x64xf32>
    %30 = arith.mulf %25, %29 : vector<4x8x64xf32>
    %31 = vector.shape_cast %9 : vector<1x64xf32> to vector<1x1x64xf32>
    %32 = vector.broadcast %31 : vector<1x1x64xf32> to vector<4x8x64xf32>
    %33 = arith.mulf %30, %32 : vector<4x8x64xf32>
    %34 = vector.shape_cast %10 : vector<1x64xf32> to vector<1x1x64xf32>
    %35 = vector.broadcast %34 : vector<1x1x64xf32> to vector<4x8x64xf32>
    %36 = arith.addf %33, %35 : vector<4x8x64xf32>
    %c0_22 = arith.constant 0 : index
    %c0_23 = arith.constant 0 : index
    %c0_24 = arith.constant 0 : index
    %37 = vector.load %arg7[%c0_22, %c0_23, %c0_24] : memref<4x8x64xf32, #tpu.memory_space<vmem>>, vector<4x8x64xf32>
    tpu.vector_store %arg7[%c0_22, %c0_23, %c0_24], %36 {strides = array<i32>} : memref<4x8x64xf32, #tpu.memory_space<vmem>>, vector<4x8x64xf32>,
    return
  }
  func.func @transform_0(%arg0: i32) -> (i32, i32, i32, i32) {
    %c0_i32 = arith.constant 0 : i32
    %c0_i32_0 = arith.constant 0 : i32
    %c0_i32_1 = arith.constant 0 : i32
    %c0_i32_2 = arith.constant 0 : i32
    return %arg0, %c0_i32, %c0_i32_0, %c0_i32_1 : i32, i32, i32, i32
  }
  func.func @transform_1(%arg0: i32) -> (i32, i32, i32, i32) {
    %c1_i32 = arith.constant 1 : i32
    %c0_i32 = arith.constant 0 : i32
    %c0_i32_0 = arith.constant 0 : i32
    %c0_i32_1 = arith.constant 0 : i32
    return %arg0, %c1_i32, %c0_i32, %c0_i32_0 : i32, i32, i32, i32
  }
  func.func @transform_2(%arg0: i32) -> (i32, i32) {
    %c0_i32 = arith.constant 0 : i32
    %c0_i32_0 = arith.constant 0 : i32
    %c0_i32_1 = arith.constant 0 : i32
    return %c0_i32, %c0_i32_0 : i32, i32
  }
  func.func @transform_3(%arg0: i32) -> (i32, i32) {
    %c0_i32 = arith.constant 0 : i32
    %c0_i32_0 = arith.constant 0 : i32
    %c0_i32_1 = arith.constant 0 : i32
    return %c0_i32, %c0_i32_0 : i32, i32
  }
  func.func @transform_4(%arg0: i32) -> (i32, i32) {
    %c0_i32 = arith.constant 0 : i32
    %c0_i32_0 = arith.constant 0 : i32
    %c0_i32_1 = arith.constant 0 : i32
    return %c0_i32, %c0_i32_0 : i32, i32
  }
  func.func @transform_5(%arg0: i32) -> (i32, i32) {
    %c0_i32 = arith.constant 0 : i32
    %c0_i32_0 = arith.constant 0 : i32
    %c0_i32_1 = arith.constant 0 : i32
    return %c0_i32, %c0_i32_0 : i32, i32
  }
  func.func @transform_6(%arg0: i32) -> (i32, i32, i32) {
    %c0_i32 = arith.constant 0 : i32
    %c0_i32_0 = arith.constant 0 : i32
    %c0_i32_1 = arith.constant 0 : i32
    return %arg0, %c0_i32, %c0_i32_0 : i32, i32, i32
  }
}

module attributes {stable_mosaic.version = 11 : i64} {
  func.func @_kernel_rank3(%arg0: i32, %arg1: memref<4x1x8x64xf32, #tpu.memory_space<vmem>>, %arg2: memref<4x1x8x64xf32, #tpu.memory_space<vmem>>, %arg3: memref<64x64xf32, #tpu.memory_space<vmem>>, %arg4: memref<64x64xf32, #tpu.memory_space<vmem>>, %arg5: memref<1x64xf32, #tpu.memory_space<vmem>>, %arg6: memref<1x64xf32, #tpu.memory_space<vmem>>, %arg7: memref<4x8x64xf32, #tpu.memory_space<vmem>>) attributes {dimension_semantics = [#tpu.dimension_semantics<parallel>], iteration_bounds = array<i64: 4>, scalar_prefetch = 0 : i64, scratch_operands = 0 : i64, tpu.core_type = #tpu.core_type<tc>, window_params = [{transform_indices = @transform_0, window_bounds = array<i64: 4, 1, 8, 64>}, {transform_indices = @transform_1, window_bounds = array<i64: 4, 1, 8, 64>}, {pipeline_mode = #tpu.pipeline_mode<synchronous>, transform_indices = @transform_2, window_bounds = array<i64: 64, 64>}, {pipeline_mode = #tpu.pipeline_mode<synchronous>, transform_indices = @transform_3, window_bounds = array<i64: 64, 64>}, {pipeline_mode = #tpu.pipeline_mode<synchronous>, transform_indices = @transform_4, window_bounds = array<i64: 1, 64>}, {pipeline_mode = #tpu.pipeline_mode<synchronous>, transform_indices = @transform_5, window_bounds = array<i64: 1, 64>}, {transform_indices = @transform_6, window_bounds = array<i64: 4, 8, 64>}]} {
    %c0 = arith.constant 0 : index
    %c0_0 = arith.constant 0 : index
    %c0_1 = arith.constant 0 : index
    %c0_2 = arith.constant 0 : index
    %0 = vector.load %arg1[%c0, %c0_0, %c0_1, %c0_2] : memref<4x1x8x64xf32, #tpu.memory_space<vmem>>, vector<4x1x8x64xf32>
    %1 = vector.shape_cast %0 : vector<4x1x8x64xf32> to vector<4x8x64xf32>
    %c0_3 = arith.constant 0 : index
    %c0_4 = arith.constant 0 : index
    %2 = vector.load %arg3[%c0_3, %c0_4] : memref<64x64xf32, #tpu.memory_space<vmem>>, vector<64x64xf32>
    %cst = arith.constant dense<0.000000e+00> : vector<4x8x64xf32>
    %3 = tpu.matmul %1, %2, %cst {dimension_numbers = #tpu.dot_dimension_numbers<[2], [0], [0, 1], [1], [0, 0, 0, 1, 1, 1], [], []>} : vector<4x8x64xf32>, vector<64x64xf32>, vector<4x8x64xf32> -> vector<4x8x64xf32>
    %c0_5 = arith.constant 0 : index
    %c0_6 = arith.constant 0 : index
    %c0_7 = arith.constant 0 : index
    %c0_8 = arith.constant 0 : index
    %4 = vector.load %arg2[%c0_5, %c0_6, %c0_7, %c0_8] : memref<4x1x8x64xf32, #tpu.memory_space<vmem>>, vector<4x1x8x64xf32>
    %5 = vector.shape_cast %4 : vector<4x1x8x64xf32> to vector<4x8x64xf32>
    %c0_9 = arith.constant 0 : index
    %c0_10 = arith.constant 0 : index
    %6 = vector.load %arg4[%c0_9, %c0_10] : memref<64x64xf32, #tpu.memory_space<vmem>>, vector<64x64xf32>
    %cst_11 = arith.constant dense<0.000000e+00> : vector<4x8x64xf32>
    %7 = tpu.matmul %5, %6, %cst_11 {dimension_numbers = #tpu.dot_dimension_numbers<[2], [0], [0, 1], [1], [0, 0, 0, 1, 1, 1], [], []>} : vector<4x8x64xf32>, vector<64x64xf32>, vector<4x8x64xf32> -> vector<4x8x64xf32>
    %8 = arith.addf %3, %7 : vector<4x8x64xf32>
    %c0_12 = arith.constant 0 : index
    %c0_13 = arith.constant 0 : index
    %9 = vector.load %arg5[%c0_12, %c0_13] : memref<1x64xf32, #tpu.memory_space<vmem>>, vector<1x64xf32>
    %c0_14 = arith.constant 0 : index
    %c0_15 = arith.constant 0 : index
    %10 = vector.load %arg6[%c0_14, %c0_15] : memref<1x64xf32, #tpu.memory_space<vmem>>, vector<1x64xf32>
    %cst_16 = arith.constant dense<0.000000e+00> : vector<4x8xf32>
    %11 = vector.multi_reduction <add>, %8, %cst_16 [2] : vector<4x8x64xf32> to vector<4x8xf32>
    %12 = vector.shape_cast %11 : vector<4x8xf32> to vector<4x8x1xf32>
    %13 = arith.mulf %8, %8 : vector<4x8x64xf32>
    %cst_17 = arith.constant dense<0.000000e+00> : vector<4x8xf32>
    %14 = vector.multi_reduction <add>, %13, %cst_17 [2] : vector<4x8x64xf32> to vector<4x8xf32>
    %15 = vector.shape_cast %14 : vector<4x8xf32> to vector<4x8x1xf32>
    %cst_18 = arith.constant 1.562500e-02 : f32
    %16 = vector.broadcast %cst_18 : f32 to vector<4x8x1xf32>
    %17 = arith.mulf %12, %16 : vector<4x8x1xf32>
    %cst_19 = arith.constant 1.562500e-02 : f32
    %18 = vector.broadcast %cst_19 : f32 to vector<4x8x1xf32>
    %19 = arith.mulf %15, %18 : vector<4x8x1xf32>
    %20 = arith.mulf %17, %17 : vector<4x8x1xf32>
    %21 = arith.subf %19, %20 : vector<4x8x1xf32>
    %cst_20 = arith.constant 0.000000e+00 : f32
    %22 = vector.broadcast %cst_20 : f32 to vector<4x8x1xf32>
    %23 = arith.maximumf %21, %22 : vector<4x8x1xf32>
    %24 = vector.broadcast %17 : vector<4x8x1xf32> to vector<4x8x64xf32>
    %25 = arith.subf %8, %24 : vector<4x8x64xf32>
    %cst_21 = arith.constant 9.99999974E-6 : f32
    %26 = vector.broadcast %cst_21 : f32 to vector<4x8x1xf32>
    %27 = arith.addf %23, %26 : vector<4x8x1xf32>
    %28 = math.rsqrt %27 : vector<4x8x1xf32>
    %29 = vector.broadcast %28 : vector<4x8x1xf32> to vector<4x8x64xf32>
    %30 = arith.mulf %25, %29 : vector<4x8x64xf32>
    %31 = vector.shape_cast %9 : vector<1x64xf32> to vector<1x1x64xf32>
    %32 = vector.broadcast %31 : vector<1x1x64xf32> to vector<4x8x64xf32>
    %33 = arith.mulf %30, %32 : vector<4x8x64xf32>
    %34 = vector.shape_cast %10 : vector<1x64xf32> to vector<1x1x64xf32>
    %35 = vector.broadcast %34 : vector<1x1x64xf32> to vector<4x8x64xf32>
    %36 = arith.addf %33, %35 : vector<4x8x64xf32>
    %c0_22 = arith.constant 0 : index
    %c0_23 = arith.constant 0 : index
    %c0_24 = arith.constant 0 : index
    %37 = vector.load %arg7[%c0_22, %c0_23, %c0_24] : memref<4x8x64xf32, #tpu.memory_space<vmem>>, vector<4x8x64xf32>
    tpu.vector_store %arg7[%c0_22, %c0_23, %c0_24], %36 {strides = array<i32>} : memref<4x8x64xf32, #tpu.memory_space<vmem>>, vector<4x8x64xf32>,
    return
  }
  func.func @transform_0(%arg0: i32) -> (i32, i32, i32, i32) {
    %c0_i32 = arith.constant 0 : i32
    %c0_i32_0 = arith.constant 0 : i32
    %c0_i32_1 = arith.constant 0 : i32
    %c0_i32_2 = arith.constant 0 : i32
    return %arg0, %c0_i32, %c0_i32_0, %c0_i32_1 : i32, i32, i32, i32
  }
  func.func @transform_1(%arg0: i32) -> (i32, i32, i32, i32) {
    %c1_i32 = arith.constant 1 : i32
    %c0_i32 = arith.constant 0 : i32
    %c0_i32_0 = arith.constant 0 : i32
    %c0_i32_1 = arith.constant 0 : i32
    return %arg0, %c1_i32, %c0_i32, %c0_i32_0 : i32, i32, i32, i32
  }
  func.func @transform_2(%arg0: i32) -> (i32, i32) {
    %c0_i32 = arith.constant 0 : i32
    %c0_i32_0 = arith.constant 0 : i32
    %c0_i32_1 = arith.constant 0 : i32
    return %c0_i32, %c0_i32_0 : i32, i32
  }
  func.func @transform_3(%arg0: i32) -> (i32, i32) {
    %c0_i32 = arith.constant 0 : i32
    %c0_i32_0 = arith.constant 0 : i32
    %c0_i32_1 = arith.constant 0 : i32
    return %c0_i32, %c0_i32_0 : i32, i32
  }
  func.func @transform_4(%arg0: i32) -> (i32, i32) {
    %c0_i32 = arith.constant 0 : i32
    %c0_i32_0 = arith.constant 0 : i32
    %c0_i32_1 = arith.constant 0 : i32
    return %c0_i32, %c0_i32_0 : i32, i32
  }
  func.func @transform_5(%arg0: i32) -> (i32, i32) {
    %c0_i32 = arith.constant 0 : i32
    %c0_i32_0 = arith.constant 0 : i32
    %c0_i32_1 = arith.constant 0 : i32
    return %c0_i32, %c0_i32_0 : i32, i32
  }
  func.func @transform_6(%arg0: i32) -> (i32, i32, i32) {
    %c0_i32 = arith.constant 0 : i32
    %c0_i32_0 = arith.constant 0 : i32
    %c0_i32_1 = arith.constant 0 : i32
    return %arg0, %c0_i32, %c0_i32_0 : i32, i32, i32
  }
}

module attributes {stable_mosaic.version = 11 : i64} {
  func.func @_kernel_flatten(%arg0: i32, %arg1: memref<4x1x8x64xf32, #tpu.memory_space<vmem>>, %arg2: memref<4x1x8x64xf32, #tpu.memory_space<vmem>>, %arg3: memref<64x64xf32, #tpu.memory_space<vmem>>, %arg4: memref<64x64xf32, #tpu.memory_space<vmem>>, %arg5: memref<1x64xf32, #tpu.memory_space<vmem>>, %arg6: memref<1x64xf32, #tpu.memory_space<vmem>>, %arg7: memref<4x8x64xf32, #tpu.memory_space<vmem>>) attributes {dimension_semantics = [#tpu.dimension_semantics<parallel>], iteration_bounds = array<i64: 4>, scalar_prefetch = 0 : i64, scratch_operands = 0 : i64, tpu.core_type = #tpu.core_type<tc>, window_params = [{transform_indices = @transform_0, window_bounds = array<i64: 4, 1, 8, 64>}, {transform_indices = @transform_1, window_bounds = array<i64: 4, 1, 8, 64>}, {pipeline_mode = #tpu.pipeline_mode<synchronous>, transform_indices = @transform_2, window_bounds = array<i64: 64, 64>}, {pipeline_mode = #tpu.pipeline_mode<synchronous>, transform_indices = @transform_3, window_bounds = array<i64: 64, 64>}, {pipeline_mode = #tpu.pipeline_mode<synchronous>, transform_indices = @transform_4, window_bounds = array<i64: 1, 64>}, {pipeline_mode = #tpu.pipeline_mode<synchronous>, transform_indices = @transform_5, window_bounds = array<i64: 1, 64>}, {transform_indices = @transform_6, window_bounds = array<i64: 4, 8, 64>}]} {
    %c0 = arith.constant 0 : index
    %c0_0 = arith.constant 0 : index
    %c0_1 = arith.constant 0 : index
    %c0_2 = arith.constant 0 : index
    %0 = vector.load %arg1[%c0, %c0_0, %c0_1, %c0_2] : memref<4x1x8x64xf32, #tpu.memory_space<vmem>>, vector<4x1x8x64xf32>
    %1 = vector.shape_cast %0 : vector<4x1x8x64xf32> to vector<4x8x64xf32>
    %2 = vector.shape_cast %1 : vector<4x8x64xf32> to vector<32x64xf32>
    %c0_3 = arith.constant 0 : index
    %c0_4 = arith.constant 0 : index
    %c0_5 = arith.constant 0 : index
    %c0_6 = arith.constant 0 : index
    %3 = vector.load %arg2[%c0_3, %c0_4, %c0_5, %c0_6] : memref<4x1x8x64xf32, #tpu.memory_space<vmem>>, vector<4x1x8x64xf32>
    %4 = vector.shape_cast %3 : vector<4x1x8x64xf32> to vector<4x8x64xf32>
    %5 = vector.shape_cast %4 : vector<4x8x64xf32> to vector<32x64xf32>
    %c0_7 = arith.constant 0 : index
    %c0_8 = arith.constant 0 : index
    %6 = vector.load %arg3[%c0_7, %c0_8] : memref<64x64xf32, #tpu.memory_space<vmem>>, vector<64x64xf32>
    %cst = arith.constant dense<0.000000e+00> : vector<32x64xf32>
    %7 = tpu.matmul %2, %6, %cst {dimension_numbers = #tpu.dot_dimension_numbers<[1], [0], [0], [1], [0, 0, 1, 1], [], []>} : vector<32x64xf32>, vector<64x64xf32>, vector<32x64xf32> -> vector<32x64xf32>
    %c0_9 = arith.constant 0 : index
    %c0_10 = arith.constant 0 : index
    %8 = vector.load %arg4[%c0_9, %c0_10] : memref<64x64xf32, #tpu.memory_space<vmem>>, vector<64x64xf32>
    %cst_11 = arith.constant dense<0.000000e+00> : vector<32x64xf32>
    %9 = tpu.matmul %5, %8, %cst_11 {dimension_numbers = #tpu.dot_dimension_numbers<[1], [0], [0], [1], [0, 0, 1, 1], [], []>} : vector<32x64xf32>, vector<64x64xf32>, vector<32x64xf32> -> vector<32x64xf32>
    %10 = arith.addf %7, %9 : vector<32x64xf32>
    %c0_12 = arith.constant 0 : index
    %c0_13 = arith.constant 0 : index
    %11 = vector.load %arg5[%c0_12, %c0_13] : memref<1x64xf32, #tpu.memory_space<vmem>>, vector<1x64xf32>
    %c0_14 = arith.constant 0 : index
    %c0_15 = arith.constant 0 : index
    %12 = vector.load %arg6[%c0_14, %c0_15] : memref<1x64xf32, #tpu.memory_space<vmem>>, vector<1x64xf32>
    %cst_16 = arith.constant dense<0.000000e+00> : vector<32xf32>
    %13 = vector.multi_reduction <add>, %10, %cst_16 [1] : vector<32x64xf32> to vector<32xf32>
    %14 = vector.shape_cast %13 : vector<32xf32> to vector<32x1xf32>
    %15 = arith.mulf %10, %10 : vector<32x64xf32>
    %cst_17 = arith.constant dense<0.000000e+00> : vector<32xf32>
    %16 = vector.multi_reduction <add>, %15, %cst_17 [1] : vector<32x64xf32> to vector<32xf32>
    %17 = vector.shape_cast %16 : vector<32xf32> to vector<32x1xf32>
    %cst_18 = arith.constant 1.562500e-02 : f32
    %18 = vector.broadcast %cst_18 : f32 to vector<32x1xf32>
    %19 = arith.mulf %14, %18 : vector<32x1xf32>
    %cst_19 = arith.constant 1.562500e-02 : f32
    %20 = vector.broadcast %cst_19 : f32 to vector<32x1xf32>
    %21 = arith.mulf %17, %20 : vector<32x1xf32>
    %22 = arith.mulf %19, %19 : vector<32x1xf32>
    %23 = arith.subf %21, %22 : vector<32x1xf32>
    %cst_20 = arith.constant 0.000000e+00 : f32
    %24 = vector.broadcast %cst_20 : f32 to vector<32x1xf32>
    %25 = arith.maximumf %23, %24 : vector<32x1xf32>
    %26 = vector.broadcast %19 : vector<32x1xf32> to vector<32x64xf32>
    %27 = arith.subf %10, %26 : vector<32x64xf32>
    %cst_21 = arith.constant 9.99999974E-6 : f32
    %28 = vector.broadcast %cst_21 : f32 to vector<32x1xf32>
    %29 = arith.addf %25, %28 : vector<32x1xf32>
    %30 = math.rsqrt %29 : vector<32x1xf32>
    %31 = vector.broadcast %30 : vector<32x1xf32> to vector<32x64xf32>
    %32 = arith.mulf %27, %31 : vector<32x64xf32>
    %33 = vector.broadcast %11 : vector<1x64xf32> to vector<32x64xf32>
    %34 = arith.mulf %32, %33 : vector<32x64xf32>
    %35 = vector.broadcast %12 : vector<1x64xf32> to vector<32x64xf32>
    %36 = arith.addf %34, %35 : vector<32x64xf32>
    %37 = vector.shape_cast %36 : vector<32x64xf32> to vector<4x8x64xf32>
    %c0_22 = arith.constant 0 : index
    %c0_23 = arith.constant 0 : index
    %c0_24 = arith.constant 0 : index
    %38 = vector.load %arg7[%c0_22, %c0_23, %c0_24] : memref<4x8x64xf32, #tpu.memory_space<vmem>>, vector<4x8x64xf32>
    tpu.vector_store %arg7[%c0_22, %c0_23, %c0_24], %37 {strides = array<i32>} : memref<4x8x64xf32, #tpu.memory_space<vmem>>, vector<4x8x64xf32>,
    return
  }
  func.func @transform_0(%arg0: i32) -> (i32, i32, i32, i32) {
    %c0_i32 = arith.constant 0 : i32
    %c0_i32_0 = arith.constant 0 : i32
    %c0_i32_1 = arith.constant 0 : i32
    %c0_i32_2 = arith.constant 0 : i32
    return %arg0, %c0_i32, %c0_i32_0, %c0_i32_1 : i32, i32, i32, i32
  }
  func.func @transform_1(%arg0: i32) -> (i32, i32, i32, i32) {
    %c1_i32 = arith.constant 1 : i32
    %c0_i32 = arith.constant 0 : i32
    %c0_i32_0 = arith.constant 0 : i32
    %c0_i32_1 = arith.constant 0 : i32
    return %arg0, %c1_i32, %c0_i32, %c0_i32_0 : i32, i32, i32, i32
  }
  func.func @transform_2(%arg0: i32) -> (i32, i32) {
    %c0_i32 = arith.constant 0 : i32
    %c0_i32_0 = arith.constant 0 : i32
    %c0_i32_1 = arith.constant 0 : i32
    return %c0_i32, %c0_i32_0 : i32, i32
  }
  func.func @transform_3(%arg0: i32) -> (i32, i32) {
    %c0_i32 = arith.constant 0 : i32
    %c0_i32_0 = arith.constant 0 : i32
    %c0_i32_1 = arith.constant 0 : i32
    return %c0_i32, %c0_i32_0 : i32, i32
  }
  func.func @transform_4(%arg0: i32) -> (i32, i32) {
    %c0_i32 = arith.constant 0 : i32
    %c0_i32_0 = arith.constant 0 : i32
    %c0_i32_1 = arith.constant 0 : i32
    return %c0_i32, %c0_i32_0 : i32, i32
  }
  func.func @transform_5(%arg0: i32) -> (i32, i32) {
    %c0_i32 = arith.constant 0 : i32
    %c0_i32_0 = arith.constant 0 : i32
    %c0_i32_1 = arith.constant 0 : i32
    return %c0_i32, %c0_i32_0 : i32, i32
  }
  func.func @transform_6(%arg0: i32) -> (i32, i32, i32) {
    %c0_i32 = arith.constant 0 : i32
    %c0_i32_0 = arith.constant 0 : i32
    %c0_i32_1 = arith.constant 0 : i32
    return %arg0, %c0_i32, %c0_i32_0 : i32, i32, i32
  }
}

</mosaic_0001>

<llo_original>
// kernel: tpu_custom_call.1
$region0: #{tpu_custom_call.1}
  #allocation0 [shape = 'u32[]', space=smem, size = 0x4, offset = 0x4, fixed_abs, tag = 'smem constant byte address 0x4 - core index']
  #allocation1 [shape = 'u32[72,128]{1,0:T(1,128)}', space=vmem, size = 0x9000, scoped, tag = 'internal scratch']
  %s0 = inlined_call_operand.hbm [shape: f32[16,2,8,64], index: 0, kind: input, shape index: {}]
  %s1 = inlined_call_operand.hbm [shape: f32[16,2,8,64], index: 1, kind: input, shape index: {}]
  %s2 = inlined_call_operand.hbm [shape: f32[64,64], index: 2, kind: input, shape index: {}]
  %s3 = inlined_call_operand.hbm [shape: f32[64,64], index: 3, kind: input, shape index: {}]
  %s4 = inlined_call_operand.vmem [shape: f32[1,64], index: 4, kind: input, shape index: {}]
  %s5 = inlined_call_operand.vmem [shape: f32[1,64], index: 5, kind: input, shape index: {}]
  %s6 = inlined_call_operand.hbm [shape: f32[16,8,64], index: 6, kind: output, shape index: {}]
  %s7 = sld [smem:[#allocation0]]
  $region73: #{tpu_custom_call.1} parent=0
    _
  %s9 = ssub.s32 1, %s7
  %s10 = scalar_select 0, %s9, %s7
  $region1: #{tpu_custom_call.1} parent=0
    #allocation2 [shape = 'u8[32768]{0}', space=vmem, size = 0x8000, scoped, tag = 'input window, operand 0']
    #allocation3 [shape = 's32[2]{0}', space=sflag, size = 0x8, scoped, tag = 'scoped memory for tpu_custom_call.1']
    #allocation4 [shape = 's32[2]{0}', space=sflag, size = 0x8, scoped, tag = 'scoped memory for tpu_custom_call.1']
    #allocation5 [shape = 'u8[32768]{0}', space=vmem, size = 0x8000, scoped, tag = 'input window, operand 1']
    #allocation6 [shape = 's32[2]{0}', space=sflag, size = 0x8, scoped, tag = 'scoped memory for tpu_custom_call.1']
    #allocation7 [shape = 'u8[32768]{0}', space=vmem, size = 0x8000, scoped, tag = 'input window, operand 2, single buffered']
    #allocation8 [shape = 'u8[32768]{0}', space=vmem, size = 0x8000, scoped, tag = 'input window, operand 3, single buffered']
    #allocation9 [shape = 's32[1]{0}', space=sflag, size = 0x4, scoped, tag = 'scoped memory for tpu_custom_call.1']
    #allocation10 [shape = 'u8[32768]{0}', space=vmem, size = 0x8000, scoped, tag = 'output window, operand 0']
    %11 = vsyncpa [#allocation3], 0
    %s12 = scalar_lea.sflag [#allocation3], 1
    %13 = vsyncpa %s12, 0
    %14 = vsyncpa [#allocation6], 0
    %s15 = scalar_lea.sflag [#allocation6], 1
    %16 = vsyncpa %s15, 0
    %17 = vsyncpa [#allocation9], 0
    %18 = vsyncpa [#allocation4], 0
    %s19 = scalar_lea.sflag [#allocation4], 1
    %20 = vsyncpa %s19, 0
    loop: start=0, step=1, limit=6
    $region2: #{tpu_custom_call.1} parent=1 // loop_pre_header
      _
    $region3: #{tpu_custom_call.1} parent=1 // loop_header
      %s22 = sphi 0, %s26
      %p23 = scmp.ge.s32.totalorder %s22, 6
      %s32 = sphi 0, %s34
      %s35 = sphi 0, %s32
      %s36 = sphi 0, %s35
      %s52 = sphi 0, %s36
      %s58 = sphi 0, %s60
      %s61 = sphi 0, %s58
      %s62 = sphi 0, %s61
      %s78 = sphi 0, %s62
      %s82 = sphi 0, %s82
      %s84 = sphi 0, %s82
      %s85 = sphi 0, %s84
      %s99 = sphi 0, %s85
      %s103 = sphi 0, %s103
      %s105 = sphi 0, %s103
      %s106 = sphi 0, %s105
      %s120 = sphi 0, %s106
      %s124 = sphi 0, %s124
      %s126 = sphi 0, %s124
      %s127 = sphi 0, %s126
      %s141 = sphi 0, %s127
      %s145 = sphi 0, %s145
      %s147 = sphi 0, %s145
      %s148 = sphi 0, %s147
      %s162 = sphi 0, %s148
      %s168 = sphi 0, %s170
      %s171 = sphi 0, %s168
      %s172 = sphi 0, %s171
      %s188 = sphi 0, %s172
    $region4: #{tpu_custom_call.1} parent=1 // loop_header_branch
      %25 = sbr.rel (%p23) target = $region8
    $region5: #{tpu_custom_call.1} parent=1 // loop_body
      %s27 = ssub.s32 %s22, 1
      %s28 = ssub.s32 %s22, 2
      %s29 = sadd.s32 %s22, 1
      %s30 = ssub.s32 %s22, %s29
      %p31 = scmp.eq.s32.totalorder %s30, 0
      %s33 = sadd.s32 %s32, 1
      %s34 = scalar_select %p31, %s32, %s33
      %p37 = pneg %p31
      %p38 = scmp.eq.s32.totalorder %s22, 3
      %p39 = por %p37, %p38
      %p40 = scmp.ne.s32.totalorder %s32, %s35
      %p41 = scmp.eq.s32.totalorder %s22, 0
      %p42 = por %p40, %p41
      %p43 = scmp.ne.s32.totalorder %s32, %s35
      %p44 = scmp.eq.s32.totalorder %s27, 3
      %p45 = por %p43, %p44
      %p46 = scmp.ne.s32.totalorder %s35, %s36
      %p47 = scmp.eq.s32.totalorder %s27, 0
      %p48 = por %p46, %p47
      %p49 = scmp.ne.s32.totalorder %s35, %s36
      %p50 = scmp.eq.s32.totalorder %s28, 3
      %p51 = por %p49, %p50
      %p53 = scmp.ne.s32.totalorder %s36, %s52
      %p54 = scmp.eq.s32.totalorder %s28, 0
      %p55 = por %p53, %p54
      %s56 = ssub.s32 %s22, %s29
      %p57 = scmp.eq.s32.totalorder %s56, 0
      %s59 = sadd.s32 %s58, 1
      %s60 = scalar_select %p57, %s58, %s59
      %p63 = pneg %p57
      %p64 = scmp.eq.s32.totalorder %s22, 3
      %p65 = por %p63, %p64
      %p66 = scmp.ne.s32.totalorder %s58, %s61
      %p67 = scmp.eq.s32.totalorder %s22, 0
      %p68 = por %p66, %p67
      %p69 = scmp.ne.s32.totalorder %s58, %s61
      %p70 = scmp.eq.s32.totalorder %s27, 3
      %p71 = por %p69, %p70
      %p72 = scmp.ne.s32.totalorder %s61, %s62
      %p73 = scmp.eq.s32.totalorder %s27, 0
      %p74 = por %p72, %p73
      %p75 = scmp.ne.s32.totalorder %s61, %s62
      %p76 = scmp.eq.s32.totalorder %s28, 3
      %p77 = por %p75, %p76
      %p79 = scmp.ne.s32.totalorder %s62, %s78
      %p80 = scmp.eq.s32.totalorder %s28, 0
      %p81 = por %p79, %p80
      %s83 = sadd.s32 %s82, 1
      %p86 = scmp.eq.s32.totalorder %s22, 3
      %p87 = scmp.ne.s32.totalorder %s82, %s84
      %p88 = scmp.eq.s32.totalorder %s22, 0
      %p89 = por %p87, %p88
      %p90 = scmp.ne.s32.totalorder %s82, %s84
      %p91 = scmp.eq.s32.totalorder %s27, 3
      %p92 = por %p90, %p91
      %p93 = scmp.ne.s32.totalorder %s84, %s85
      %p94 = scmp.eq.s32.totalorder %s27, 0
      %p95 = por %p93, %p94
      %p96 = scmp.ne.s32.totalorder %s84, %s85
      %p97 = scmp.eq.s32.totalorder %s28, 3
      %p98 = por %p96, %p97
      %p100 = scmp.ne.s32.totalorder %s85, %s99
      %p101 = scmp.eq.s32.totalorder %s28, 0
      %p102 = por %p100, %p101
      %s104 = sadd.s32 %s103, 1
      %p107 = scmp.eq.s32.totalorder %s22, 3
      %p108 = scmp.ne.s32.totalorder %s103, %s105
      %p109 = scmp.eq.s32.totalorder %s22, 0
      %p110 = por %p108, %p109
      %p111 = scmp.ne.s32.totalorder %s103, %s105
      %p112 = scmp.eq.s32.totalorder %s27, 3
      %p113 = por %p111, %p112
      %p114 = scmp.ne.s32.totalorder %s105, %s106
      %p115 = scmp.eq.s32.totalorder %s27, 0
      %p116 = por %p114, %p115
      %p117 = scmp.ne.s32.totalorder %s105, %s106
      %p118 = scmp.eq.s32.totalorder %s28, 3
      %p119 = por %p117, %p118
      %p121 = scmp.ne.s32.totalorder %s106, %s120
      %p122 = scmp.eq.s32.totalorder %s28, 0
      %p123 = por %p121, %p122
      %s125 = sadd.s32 %s124, 1
      %p128 = scmp.eq.s32.totalorder %s22, 3
      %p129 = scmp.ne.s32.totalorder %s124, %s126
      %p130 = scmp.eq.s32.totalorder %s22, 0
      %p131 = por %p129, %p130
      %p132 = scmp.ne.s32.totalorder %s124, %s126
      %p133 = scmp.eq.s32.totalorder %s27, 3
      %p134 = por %p132, %p133
      %p135 = scmp.ne.s32.totalorder %s126, %s127
      %p136 = scmp.eq.s32.totalorder %s27, 0
      %p137 = por %p135, %p136
      %p138 = scmp.ne.s32.totalorder %s126, %s127
      %p139 = scmp.eq.s32.totalorder %s28, 3
      %p140 = por %p138, %p139
      %p142 = scmp.ne.s32.totalorder %s127, %s141
      %p143 = scmp.eq.s32.totalorder %s28, 0
      %p144 = por %p142, %p143
      %s146 = sadd.s32 %s145, 1
      %p149 = scmp.eq.s32.totalorder %s22, 3
      %p150 = scmp.ne.s32.totalorder %s145, %s147
      %p151 = scmp.eq.s32.totalorder %s22, 0
      %p152 = por %p150, %p151
      %p153 = scmp.ne.s32.totalorder %s145, %s147
      %p154 = scmp.eq.s32.totalorder %s27, 3
      %p155 = por %p153, %p154
      %p156 = scmp.ne.s32.totalorder %s147, %s148
      %p157 = scmp.eq.s32.totalorder %s27, 0
      %p158 = por %p156, %p157
      %p159 = scmp.ne.s32.totalorder %s147, %s148
      %p160 = scmp.eq.s32.totalorder %s28, 3
      %p161 = por %p159, %p160
      %p163 = scmp.ne.s32.totalorder %s148, %s162
      %p164 = scmp.eq.s32.totalorder %s28, 0
      %p165 = por %p163, %p164
      %s166 = ssub.s32 %s22, %s29
      %p167 = scmp.eq.s32.totalorder %s166, 0
      %s169 = sadd.s32 %s168, 1
      %s170 = scalar_select %p167, %s168, %s169
      %p173 = pneg %p167
      %p174 = scmp.eq.s32.totalorder %s22, 3
      %p175 = por %p173, %p174
      %p176 = scmp.ne.s32.totalorder %s168, %s171
      %p177 = scmp.eq.s32.totalorder %s22, 0
      %p178 = por %p176, %p177
      %p179 = scmp.ne.s32.totalorder %s168, %s171
      %p180 = scmp.eq.s32.totalorder %s27, 3
      %p181 = por %p179, %p180
      %p182 = scmp.ne.s32.totalorder %s171, %s172
      %p183 = scmp.eq.s32.totalorder %s27, 0
      %p184 = por %p182, %p183
      %p185 = scmp.ne.s32.totalorder %s171, %s172
      %p186 = scmp.eq.s32.totalorder %s28, 3
      %p187 = por %p185, %p186
      %p189 = scmp.ne.s32.totalorder %s172, %s188
      %p190 = scmp.eq.s32.totalorder %s28, 0
      %p191 = por %p189, %p190
      %p192 = scmp.le.s32.totalorder 1, %s22
      %p193 = scmp.lt.s32.totalorder %s22, 5
      %p194 = pnand %p192, %p193
      %p195 = pneg %p194
      // Predicated region
      $region9: #{tpu_custom_call.1} parent=5 // pred_check
        _
      $region10: #{tpu_custom_call.1} parent=5 // pred_check_branch
        %197 = sbr.rel (%p194) target = $region12
      $region11: #{tpu_custom_call.1} parent=5 // pred_region
        %s198 = ssub.s32 %s22, 1
        // Predicated region
        $region13: #{tpu_custom_call.1} parent=11 // pred_check
          %p199 = pneg %p95
        $region14: #{tpu_custom_call.1} parent=11 // pred_check_branch
          %201 = sbr.rel (%p199) target = $region16
        $region15: #{tpu_custom_call.1} parent=11 // pred_region
          %203 = vsyncadd [#allocation6], 0
          %s204 = sshll.u32 %s2, 4
          %s205 = int_to_ptr.hbm [resolvable:$true] %s204
          %s206 = sshll.u32 [#allocation7], 4
          %s207 = int_to_ptr.vmem [resolvable:$true] %s206
          %212 = dma.hbm_to_vmem [thread:$0]  %s205, 1024, %s207, [#allocation6], 128, 128, 8
        $region16: #{tpu_custom_call.1} parent=11 // pred_fallthru
          _
        // Predicated region
        $region17: #{tpu_custom_call.1} parent=11 // pred_check
          %p213 = pneg %p116
        $region18: #{tpu_custom_call.1} parent=11 // pred_check_branch
          %215 = sbr.rel (%p213) target = $region20
        $region19: #{tpu_custom_call.1} parent=11 // pred_region
          %217 = vsyncadd [#allocation9], 0
          %s218 = sshll.u32 %s3, 4
          %s219 = int_to_ptr.hbm [resolvable:$true] %s218
          %s220 = sshll.u32 [#allocation8], 4
          %s221 = int_to_ptr.vmem [resolvable:$true] %s220
          %226 = dma.hbm_to_vmem [thread:$0]  %s219, 1024, %s221, [#allocation9], 128, 128, 8
        $region20: #{tpu_custom_call.1} parent=11 // pred_fallthru
          _
        // Predicated region
        $region21: #{tpu_custom_call.1} parent=11 // pred_check
          %p227 = pneg %p137
        $region22: #{tpu_custom_call.1} parent=11 // pred_check_branch
          %229 = sbr.rel (%p227) target = $region24
        $region23: #{tpu_custom_call.1} parent=11 // pred_region
          _
        $region24: #{tpu_custom_call.1} parent=11 // pred_fallthru
          _
        // Predicated region
        $region25: #{tpu_custom_call.1} parent=11 // pred_check
          %p230 = pneg %p158
        $region26: #{tpu_custom_call.1} parent=11 // pred_check_branch
          %232 = sbr.rel (%p230) target = $region28
        $region27: #{tpu_custom_call.1} parent=11 // pred_region
          _
        $region28: #{tpu_custom_call.1} parent=11 // pred_fallthru
          _
      $region12: #{tpu_custom_call.1} parent=5 // pred_fallthru
        _
      %p233 = scmp.lt.s32.totalorder %s22, 4
      // Predicated region
      $region29: #{tpu_custom_call.1} parent=5 // pred_check
        %p234 = pneg %p233
      $region30: #{tpu_custom_call.1} parent=5 // pred_check_branch
        %236 = sbr.rel (%p234) target = $region32
      $region31: #{tpu_custom_call.1} parent=5 // pred_region
        // Predicated region
        $region33: #{tpu_custom_call.1} parent=31 // pred_check
          %p237 = pneg %p42
        $region34: #{tpu_custom_call.1} parent=31 // pred_check_branch
          %239 = sbr.rel (%p237) target = $region36
        $region35: #{tpu_custom_call.1} parent=31 // pred_region
          %s240 = sand.u32 %s32, 1
          %s241 = scalar_lea.sflag [#allocation3], %s240
          %s242 = sand.u32 %s32, 1
          %s243 = smul.addr %s242, 32
          %s244 = scalar_lea.vmem [#allocation2], %s243
          %s245 = smul.u32 4, %s22
          %247 = vsyncadd %s241, 0
          %s248 = smul.addr %s245, 2
          %s249 = smul.addr %s248, 8
          %s250 = scalar_lea.hbm %s0, %s249
          %s251 = sshll.u32 %s250, 4
          %s252 = int_to_ptr.hbm [resolvable:$true] %s251
          %s253 = sshll.u32 %s244, 4
          %s254 = int_to_ptr.vmem [resolvable:$true] %s253
          %259 = dma.hbm_to_vmem [thread:$0]  %s252, 512, %s254, %s241, 256, 128, 8
        $region36: #{tpu_custom_call.1} parent=31 // pred_fallthru
          _
        // Predicated region
        $region37: #{tpu_custom_call.1} parent=31 // pred_check
          %p260 = pneg %p68
        $region38: #{tpu_custom_call.1} parent=31 // pred_check_branch
          %262 = sbr.rel (%p260) target = $region40
        $region39: #{tpu_custom_call.1} parent=31 // pred_region
          %s263 = sand.u32 %s22, 1
          %s264 = scalar_lea.sflag [#allocation6], %s263
          %s265 = sand.u32 %s58, 1
          %s266 = smul.addr %s265, 32
          %s267 = scalar_lea.vmem [#allocation5], %s266
          %s268 = smul.u32 4, %s22
          %270 = vsyncadd %s264, 0
          %s271 = smul.addr %s268, 2
          %s272 = sadd.s32 1, %s271
          %s273 = smul.addr %s272, 8
          %s274 = scalar_lea.hbm %s1, %s273
          %s275 = sshll.u32 %s274, 4
          %s276 = int_to_ptr.hbm [resolvable:$true] %s275
          %s277 = sshll.u32 %s267, 4
          %s278 = int_to_ptr.vmem [resolvable:$true] %s277
          %283 = dma.hbm_to_vmem [thread:$0]  %s276, 512, %s278, %s264, 256, 128, 8
        $region40: #{tpu_custom_call.1} parent=31 // pred_fallthru
          _
      $region32: #{tpu_custom_call.1} parent=5 // pred_fallthru
        _
      %p284 = scmp.le.s32.totalorder 1, %s22
      %p285 = scmp.lt.s32.totalorder %s22, 5
      %p286 = pnand %p284, %p285
      %p287 = pneg %p286
      // Predicated region
      $region41: #{tpu_custom_call.1} parent=5 // pred_check
        _
      $region42: #{tpu_custom_call.1} parent=5 // pred_check_branch
        %289 = sbr.rel (%p286) target = $region44
      $region43: #{tpu_custom_call.1} parent=5 // pred_region
        %s290 = ssub.s32 %s22, 1
        %s291 = sand.u32 %s35, 1
        %s292 = scalar_lea.sflag [#allocation3], %s291
        %s293 = sand.u32 %s35, 1
        %s294 = smul.addr %s293, 32
        %s295 = scalar_lea.vmem [#allocation2], %s294
        // Predicated region
        $region45: #{tpu_custom_call.1} parent=43 // pred_check
          %p296 = pneg %p48
        $region46: #{tpu_custom_call.1} parent=43 // pred_check_branch
          %298 = sbr.rel (%p296) target = $region48
        $region47: #{tpu_custom_call.1} parent=43 // pred_region
          %300 = dma.done %s292, 512
        $region48: #{tpu_custom_call.1} parent=43 // pred_fallthru
          _
        %s301 = sand.u32 %s27, 1
        %s302 = scalar_lea.sflag [#allocation6], %s301
        %s303 = sand.u32 %s61, 1
        %s304 = smul.addr %s303, 32
        %s305 = scalar_lea.vmem [#allocation5], %s304
        // Predicated region
        $region49: #{tpu_custom_call.1} parent=43 // pred_check
          %p306 = pneg %p74
        $region50: #{tpu_custom_call.1} parent=43 // pred_check_branch
          %308 = sbr.rel (%p306) target = $region52
        $region51: #{tpu_custom_call.1} parent=43 // pred_region
          %310 = dma.done %s302, 512
        $region52: #{tpu_custom_call.1} parent=43 // pred_fallthru
          _
        // Predicated region
        $region53: #{tpu_custom_call.1} parent=43 // pred_check
          %p311 = pneg %p95
        $region54: #{tpu_custom_call.1} parent=43 // pred_check_branch
          %313 = sbr.rel (%p311) target = $region56
        $region55: #{tpu_custom_call.1} parent=43 // pred_region
          %315 = dma.done [#allocation6], 1024
        $region56: #{tpu_custom_call.1} parent=43 // pred_fallthru
          _
        // Predicated region
        $region57: #{tpu_custom_call.1} parent=43 // pred_check
          %p316 = pneg %p116
        $region58: #{tpu_custom_call.1} parent=43 // pred_check_branch
          %318 = sbr.rel (%p316) target = $region60
        $region59: #{tpu_custom_call.1} parent=43 // pred_region
          %320 = dma.done [#allocation9], 1024
        $region60: #{tpu_custom_call.1} parent=43 // pred_fallthru
          _
        %s321 = sand.u32 %s35, 1
        %s322 = scalar_lea.sflag [#allocation3], %s321
        %s323 = sand.u32 %s35, 1
        %s324 = smul.addr %s323, 32
        %s325 = scalar_lea.vmem [#allocation2], %s324
        %p326 = pneg %p48
        %p327 = pneg %p45
        %s328 = sand.u32 %s27, 1
        %s329 = scalar_lea.sflag [#allocation6], %s328
        %s330 = sand.u32 %s61, 1
        %s331 = smul.addr %s330, 32
        %s332 = scalar_lea.vmem [#allocation5], %s331
        %p333 = pneg %p74
        %p334 = pneg %p71
        %p335 = pneg %p95
        %p336 = pneg %p92
        %p337 = pneg %p116
        %p338 = pneg %p113
        %p339 = pneg %p137
        %p340 = pneg %p134
        %p341 = pneg %p158
        %p342 = pneg %p155
        %p343 = pneg %p184
        %p344 = pneg %p181
        %s345 = sand.u32 %s171, 1
        %s346 = scalar_lea.sflag [#allocation4], %s345
        %s347 = sand.u32 %s171, 1
        %s348 = smul.addr %s347, 32
        %s349 = scalar_lea.vmem [#allocation10], %s348
        %s350 = smul.u32 4, %s27
        %s351 = smul.u32 4, %s27
        %s352 = smul.u32 4, %s27
        %v353 = vld [vmem:[%s295] sm:$0xff]
        %v354 = vld [vmem:[%s295 + $0x8] sm:$0xff]
        %v355 = vld [vmem:[%s295 + $0x10] sm:$0xff]
        %v356 = vld [vmem:[%s295 + $0x18] sm:$0xff]
        %v357 = vld [vmem:[#allocation7] sm:$0xff]
        %v358 = vld [vmem:[#allocation7 + $0x8] sm:$0xff]
        %v359 = vld [vmem:[#allocation7 + $0x10] sm:$0xff]
        %v360 = vld [vmem:[#allocation7 + $0x18] sm:$0xff]
        %v361 = vld [vmem:[#allocation7 + $0x20] sm:$0xff]
        %v362 = vld [vmem:[#allocation7 + $0x28] sm:$0xff]
        %v363 = vld [vmem:[#allocation7 + $0x30] sm:$0xff]
        %v364 = vld [vmem:[#allocation7 + $0x38] sm:$0xff]
        %v365 = vld [vmem:[%s305] sm:$0xff]
        %v366 = vld [vmem:[%s305 + $0x8] sm:$0xff]
        %v367 = vld [vmem:[%s305 + $0x10] sm:$0xff]
        %v368 = vld [vmem:[%s305 + $0x18] sm:$0xff]
        %v369 = vld [vmem:[#allocation8] sm:$0xff]
        %v370 = vld [vmem:[#allocation8 + $0x8] sm:$0xff]
        %v371 = vld [vmem:[#allocation8 + $0x10] sm:$0xff]
        %v372 = vld [vmem:[#allocation8 + $0x18] sm:$0xff]
        %v373 = vld [vmem:[#allocation8 + $0x20] sm:$0xff]
        %v374 = vld [vmem:[#allocation8 + $0x28] sm:$0xff]
        %v375 = vld [vmem:[#allocation8 + $0x30] sm:$0xff]
        %v376 = vld [vmem:[#allocation8 + $0x38] sm:$0xff]
        %vm377 = vcmask 523264
        %v379 = vsel %vm377, %v365, 0
        %v382 = vsel %vm377, %v366, 0
        %v385 = vsel %vm377, %v367, 0
        %v388 = vsel %vm377, %v368, 0
        %390 = vmatpush.msra.mxu0 0.0
        %391 = vmatpush.msra.mxu0 0.0
        %392 = vmatpush.msra.mxu0 0.0
        %393 = vmatpush.msra.mxu0 0.0
        %394 = vmatpush.msra.mxu0 0.0
        %395 = vmatpush.msra.mxu0 0.0
        %396 = vmatpush.msra.mxu0 0.0
        %397 = vmatpush.msra.mxu0 0.0
        %398 = vmatpush.msra.mxu0 %v376
        %399 = vmatpush.msra.mxu0 %v375
        %400 = vmatpush.msra.mxu0 %v374
        %401 = vmatpush.msra.mxu0 %v373
        %402 = vmatpush.msra.mxu0 %v372
        %403 = vmatpush.msra.mxu0 %v371
        %404 = vmatpush.msra.mxu0 %v370
        %405 = vmatpush.msra.mxu0 %v369
        %406 = vmatmul.f32.gmra.mxu0 %v379
        %v407 = vpop.f32.mrf.mxu0
        %v408 = vadd.f32 0.0, %v407
        %409 = vmatmul.f32.gmra.mxu0 %v382
        %v410 = vpop.f32.mrf.mxu0
        %v411 = vadd.f32 0.0, %v410
        %412 = vmatmul.f32.gmra.mxu0 %v385
        %v413 = vpop.f32.mrf.mxu0
        %v414 = vadd.f32 0.0, %v413
        %415 = vmatmul.f32.gmra.mxu0 %v388
        %v416 = vpop.f32.mrf.mxu0
        %v417 = vadd.f32 0.0, %v416
        %418 = vdwg.mxu0
        %v420 = vsel %vm377, %v353, 0
        %v423 = vsel %vm377, %v354, 0
        %v426 = vsel %vm377, %v355, 0
        %v429 = vsel %vm377, %v356, 0
        %431 = vmatpush.msra.mxu0 0.0
        %432 = vmatpush.msra.mxu0 0.0
        %433 = vmatpush.msra.mxu0 0.0
        %434 = vmatpush.msra.mxu0 0.0
        %435 = vmatpush.msra.mxu0 0.0
        %436 = vmatpush.msra.mxu0 0.0
        %437 = vmatpush.msra.mxu0 0.0
        %438 = vmatpush.msra.mxu0 0.0
        %439 = vmatpush.msra.mxu0 %v364
        %440 = vmatpush.msra.mxu0 %v363
        %441 = vmatpush.msra.mxu0 %v362
        %442 = vmatpush.msra.mxu0 %v361
        %443 = vmatpush.msra.mxu0 %v360
        %444 = vmatpush.msra.mxu0 %v359
        %445 = vmatpush.msra.mxu0 %v358
        %446 = vmatpush.msra.mxu0 %v357
        %447 = vmatmul.f32.gmra.mxu0 %v420
        %v448 = vpop.f32.mrf.mxu0
        %v449 = vadd.f32 %v408, %v448
        %450 = vmatmul.f32.gmra.mxu0 %v423
        %v451 = vpop.f32.mrf.mxu0
        %v452 = vadd.f32 %v411, %v451
        %453 = vmatmul.f32.gmra.mxu0 %v426
        %v454 = vpop.f32.mrf.mxu0
        %v455 = vadd.f32 %v414, %v454
        %456 = vmatmul.f32.gmra.mxu0 %v429
        %v457 = vpop.f32.mrf.mxu0
        %v458 = vadd.f32 %v417, %v457
        %459 = vdwg.mxu0
        %v460 = vld [vmem:[%s4] sm:$0x1]
        %v461 = vld [vmem:[%s5] sm:$0x1]
        %v462 = vsel %vm377, %v449, 0.0
        %463 = vadd.xlane.f32.xlu0 %v462
        %v464 = vpop.xlane.xlu0 %463
        %v465 = vsel %vm377, %v452, 0.0
        %466 = vadd.xlane.f32.xlu0 %v465
        %v467 = vpop.xlane.xlu0 %466
        %v468 = vsel %vm377, %v455, 0.0
        %469 = vadd.xlane.f32.xlu0 %v468
        %v470 = vpop.xlane.xlu0 %469
        %v471 = vsel %vm377, %v458, 0.0
        %472 = vadd.xlane.f32.xlu0 %v471
        %v473 = vpop.xlane.xlu0 %472
        %v474 = vmul.f32 %v449, %v449
        %v475 = vmul.f32 %v452, %v452
        %v476 = vmul.f32 %v455, %v455
        %v477 = vmul.f32 %v458, %v458
        %v478 = vsel %vm377, %v474, 0.0
        %479 = vadd.xlane.f32.xlu0 %v478
        %v480 = vpop.xlane.xlu0 %479
        %v481 = vsel %vm377, %v475, 0.0
        %482 = vadd.xlane.f32.xlu0 %v481
        %v483 = vpop.xlane.xlu0 %482
        %v484 = vsel %vm377, %v476, 0.0
        %485 = vadd.xlane.f32.xlu0 %v484
        %v486 = vpop.xlane.xlu0 %485
        %v487 = vsel %vm377, %v477, 0.0
        %488 = vadd.xlane.f32.xlu0 %v487
        %v489 = vpop.xlane.xlu0 %488
        %v490 = vmul.f32 %v464, 0.015625
        %v491 = vmul.f32 %v467, 0.015625
        %v492 = vmul.f32 %v470, 0.015625
        %v493 = vmul.f32 %v473, 0.015625
        %v494 = vmul.f32 %v480, 0.015625
        %v495 = vmul.f32 %v483, 0.015625
        %v496 = vmul.f32 %v486, 0.015625
        %v497 = vmul.f32 %v489, 0.015625
        %v498 = vmul.f32 %v490, %v490
        %v499 = vmul.f32 %v491, %v491
        %v500 = vmul.f32 %v492, %v492
        %v501 = vmul.f32 %v493, %v493
        %v502 = vsub.f32 %v494, %v498
        %v503 = vsub.f32 %v495, %v499
        %v504 = vsub.f32 %v496, %v500
        %v505 = vsub.f32 %v497, %v501
        %v506 = vmax.f32 %v502, 0.0
        %v507 = vmax.f32 %v503, 0.0
        %v508 = vmax.f32 %v504, 0.0
        %v509 = vmax.f32 %v505, 0.0
        %v510 = vsub.f32 %v449, %v490
        %v511 = vsub.f32 %v452, %v491
        %v512 = vsub.f32 %v455, %v492
        %v513 = vsub.f32 %v458, %v493
        %v514 = vadd.f32 %v506, 1e-05
        %v515 = vadd.f32 %v507, 1e-05
        %v516 = vadd.f32 %v508, 1e-05
        %v517 = vadd.f32 %v509, 1e-05
        %v518 = vrsqrt.pop %v514
        %v519 = vmul.f32 %v518, %v514
        %v520 = vmul.f32 %v519, %v518
        %v521 = vmul.f32 0.5, %v520
        %v522 = vsub.f32 1.5, %v521
        %v523 = vmul.f32 %v518, %v522
        %vm524 = vweird.f32 %v514
        %vm525 = vweird.f32 %v518
        %vm526 = vmor %vm524, %vm525
        %v527 = vsel %vm526, %v518, %v523
        %v528 = vrsqrt.pop %v515
        %v529 = vmul.f32 %v528, %v515
        %v530 = vmul.f32 %v529, %v528
        %v531 = vmul.f32 0.5, %v530
        %v532 = vsub.f32 1.5, %v531
        %v533 = vmul.f32 %v528, %v532
        %vm534 = vweird.f32 %v515
        %vm535 = vweird.f32 %v528
        %vm536 = vmor %vm534, %vm535
        %v537 = vsel %vm536, %v528, %v533
        %v538 = vrsqrt.pop %v516
        %v539 = vmul.f32 %v538, %v516
        %v540 = vmul.f32 %v539, %v538
        %v541 = vmul.f32 0.5, %v540
        %v542 = vsub.f32 1.5, %v541
        %v543 = vmul.f32 %v538, %v542
        %vm544 = vweird.f32 %v516
        %vm545 = vweird.f32 %v538
        %vm546 = vmor %vm544, %vm545
        %v547 = vsel %vm546, %v538, %v543
        %v548 = vrsqrt.pop %v517
        %v549 = vmul.f32 %v548, %v517
        %v550 = vmul.f32 %v549, %v548
        %v551 = vmul.f32 0.5, %v550
        %v552 = vsub.f32 1.5, %v551
        %v553 = vmul.f32 %v548, %v552
        %vm554 = vweird.f32 %v517
        %vm555 = vweird.f32 %v548
        %vm556 = vmor %vm554, %vm555
        %v557 = vsel %vm556, %v548, %v553
        %v558 = vmul.f32 %v510, %v527
        %v559 = vmul.f32 %v511, %v537
        %v560 = vmul.f32 %v512, %v547
        %v561 = vmul.f32 %v513, %v557
        %v563 = vperm.slane %v460, 0
        %v565 = vmul.f32 %v558, %v563
        %v566 = vmul.f32 %v559, %v563
        %v567 = vmul.f32 %v560, %v563
        %v568 = vmul.f32 %v561, %v563
        %v570 = vperm.slane %v461, 0
        %v572 = vadd.f32 %v565, %v570
        %v573 = vadd.f32 %v566, %v570
        %v574 = vadd.f32 %v567, %v570
        %v575 = vadd.f32 %v568, %v570
        %576 = vst.msk [vmem:[%s349] sm:$0xff] %vm377, %v572
        %577 = vst.msk [vmem:[%s349 + $0x8] sm:$0xff] %vm377, %v573
        %578 = vst.msk [vmem:[%s349 + $0x10] sm:$0xff] %vm377, %v574
        %579 = vst.msk [vmem:[%s349 + $0x18] sm:$0xff] %vm377, %v575
        %s580 = sand.u32 %s171, 1
        %s581 = scalar_lea.sflag [#allocation4], %s580
        %s582 = sand.u32 %s171, 1
        %s583 = smul.addr %s582, 32
        %s584 = scalar_lea.vmem [#allocation10], %s583
        // Predicated region
        $region61: #{tpu_custom_call.1} parent=43 // pred_check
          %p585 = pneg %p181
        $region62: #{tpu_custom_call.1} parent=43 // pred_check_branch
          %587 = sbr.rel (%p585) target = $region64
        $region63: #{tpu_custom_call.1} parent=43 // pred_region
          %s588 = smul.u32 4, %s27
          %590 = vsyncadd %s581, 0
          %s591 = smul.addr %s588, 8
          %s592 = scalar_lea.hbm %s6, %s591
          %s593 = sshll.u32 %s584, 4
          %s594 = int_to_ptr.vmem [resolvable:$true] %s593
          %s595 = sshll.u32 %s592, 4
          %s596 = int_to_ptr.hbm [resolvable:$true] %s595
          %601 = dma.vmem_to_hbm [thread:$0]  %s594, 512, %s596, %s581, 128, 128, 8
        $region64: #{tpu_custom_call.1} parent=43 // pred_fallthru
          _
      $region44: #{tpu_custom_call.1} parent=5 // pred_fallthru
        _
      %p602 = scmp.le.s32.totalorder 2, %s22
      // Predicated region
      $region65: #{tpu_custom_call.1} parent=5 // pred_check
        %p603 = pneg %p602
      $region66: #{tpu_custom_call.1} parent=5 // pred_check_branch
        %605 = sbr.rel (%p603) target = $region68
      $region67: #{tpu_custom_call.1} parent=5 // pred_region
        %s606 = ssub.s32 %s22, 2
        // Predicated region
        $region69: #{tpu_custom_call.1} parent=67 // pred_check
          %p607 = pneg %p187
        $region70: #{tpu_custom_call.1} parent=67 // pred_check_branch
          %609 = sbr.rel (%p607) target = $region72
        $region71: #{tpu_custom_call.1} parent=67 // pred_region
          %s610 = sand.u32 %s172, 1
          %s611 = scalar_lea.sflag [#allocation4], %s610
          %s612 = sand.u32 %s172, 1
          %s613 = smul.addr %s612, 32
          %s614 = scalar_lea.vmem [#allocation10], %s613
          %616 = dma.done %s611, 512
        $region72: #{tpu_custom_call.1} parent=67 // pred_fallthru
          _
      $region68: #{tpu_custom_call.1} parent=5 // pred_fallthru
        _
    $region6: #{tpu_custom_call.1} parent=1 // loop_footer
      %s26 = sadd.s32 1, %s22
    $region7: #{tpu_custom_call.1} parent=1 // loop_footer_branch
      %21 = sbr.rel target = $region3
    $region8: #{tpu_custom_call.1} parent=1 // loop_exit
      _
    %617 = vsyncpa [#allocation3], 1
    %s618 = scalar_lea.sflag [#allocation3], 1
    %619 = vsyncpa %s618, 1
    %620 = vsyncpa [#allocation6], 1
    %s621 = scalar_lea.sflag [#allocation6], 1
    %622 = vsyncpa %s621, 1
    %623 = vsyncpa [#allocation9], 1
    %624 = vsyncpa [#allocation4], 1
    %s625 = scalar_lea.sflag [#allocation4], 1
    %626 = vsyncpa %s625, 1

// kernel: tpu_custom_call.1
$region0: #{tpu_custom_call.1}
  #allocation0 [shape = 'u32[]', space=smem, size = 0x4, offset = 0x4, fixed_abs, tag = 'smem constant byte address 0x4 - core index']
  #allocation1 [shape = 'u32[72,128]{1,0:T(1,128)}', space=vmem, size = 0x9000, scoped, tag = 'internal scratch']
  %s0 = inlined_call_operand.hbm [shape: f32[16,2,8,64], index: 0, kind: input, shape index: {}]
  %s1 = inlined_call_operand.hbm [shape: f32[16,2,8,64], index: 1, kind: input, shape index: {}]
  %s2 = inlined_call_operand.hbm [shape: f32[64,64], index: 2, kind: input, shape index: {}]
  %s3 = inlined_call_operand.hbm [shape: f32[64,64], index: 3, kind: input, shape index: {}]
  %s4 = inlined_call_operand.vmem [shape: f32[1,64], index: 4, kind: input, shape index: {}]
  %s5 = inlined_call_operand.vmem [shape: f32[1,64], index: 5, kind: input, shape index: {}]
  %s6 = inlined_call_operand.hbm [shape: f32[16,8,64], index: 6, kind: output, shape index: {}]
  %s7 = sld [smem:[#allocation0]]
  $region73: #{tpu_custom_call.1} parent=0
    _
  %s9 = ssub.s32 1, %s7
  %s10 = scalar_select 0, %s9, %s7
  $region1: #{tpu_custom_call.1} parent=0
    #allocation2 [shape = 'u8[32768]{0}', space=vmem, size = 0x8000, scoped, tag = 'input window, operand 0']
    #allocation3 [shape = 's32[2]{0}', space=sflag, size = 0x8, scoped, tag = 'scoped memory for tpu_custom_call.1']
    #allocation4 [shape = 's32[2]{0}', space=sflag, size = 0x8, scoped, tag = 'scoped memory for tpu_custom_call.1']
    #allocation5 [shape = 'u8[32768]{0}', space=vmem, size = 0x8000, scoped, tag = 'input window, operand 1']
    #allocation6 [shape = 's32[2]{0}', space=sflag, size = 0x8, scoped, tag = 'scoped memory for tpu_custom_call.1']
    #allocation7 [shape = 'u8[32768]{0}', space=vmem, size = 0x8000, scoped, tag = 'input window, operand 2, single buffered']
    #allocation8 [shape = 'u8[32768]{0}', space=vmem, size = 0x8000, scoped, tag = 'input window, operand 3, single buffered']
    #allocation9 [shape = 's32[1]{0}', space=sflag, size = 0x4, scoped, tag = 'scoped memory for tpu_custom_call.1']
    #allocation10 [shape = 'u8[32768]{0}', space=vmem, size = 0x8000, scoped, tag = 'output window, operand 0']
    %11 = vsyncpa [#allocation3], 0
    %s12 = scalar_lea.sflag [#allocation3], 1
    %13 = vsyncpa %s12, 0
    %14 = vsyncpa [#allocation6], 0
    %s15 = scalar_lea.sflag [#allocation6], 1
    %16 = vsyncpa %s15, 0
    %17 = vsyncpa [#allocation9], 0
    %18 = vsyncpa [#allocation4], 0
    %s19 = scalar_lea.sflag [#allocation4], 1
    %20 = vsyncpa %s19, 0
    loop: start=0, step=1, limit=6
    $region2: #{tpu_custom_call.1} parent=1 // loop_pre_header
      _
    $region3: #{tpu_custom_call.1} parent=1 // loop_header
      %s22 = sphi 0, %s26
      %p23 = scmp.ge.s32.totalorder %s22, 6
      %s32 = sphi 0, %s34
      %s35 = sphi 0, %s32
      %s36 = sphi 0, %s35
      %s52 = sphi 0, %s36
      %s58 = sphi 0, %s60
      %s61 = sphi 0, %s58
      %s62 = sphi 0, %s61
      %s78 = sphi 0, %s62
      %s82 = sphi 0, %s82
      %s84 = sphi 0, %s82
      %s85 = sphi 0, %s84
      %s99 = sphi 0, %s85
      %s103 = sphi 0, %s103
      %s105 = sphi 0, %s103
      %s106 = sphi 0, %s105
      %s120 = sphi 0, %s106
      %s124 = sphi 0, %s124
      %s126 = sphi 0, %s124
      %s127 = sphi 0, %s126
      %s141 = sphi 0, %s127
      %s145 = sphi 0, %s145
      %s147 = sphi 0, %s145
      %s148 = sphi 0, %s147
      %s162 = sphi 0, %s148
      %s168 = sphi 0, %s170
      %s171 = sphi 0, %s168
      %s172 = sphi 0, %s171
      %s188 = sphi 0, %s172
    $region4: #{tpu_custom_call.1} parent=1 // loop_header_branch
      %25 = sbr.rel (%p23) target = $region8
    $region5: #{tpu_custom_call.1} parent=1 // loop_body
      %s27 = ssub.s32 %s22, 1
      %s28 = ssub.s32 %s22, 2
      %s29 = sadd.s32 %s22, 1
      %s30 = ssub.s32 %s22, %s29
      %p31 = scmp.eq.s32.totalorder %s30, 0
      %s33 = sadd.s32 %s32, 1
      %s34 = scalar_select %p31, %s32, %s33
      %p37 = pneg %p31
      %p38 = scmp.eq.s32.totalorder %s22, 3
      %p39 = por %p37, %p38
      %p40 = scmp.ne.s32.totalorder %s32, %s35
      %p41 = scmp.eq.s32.totalorder %s22, 0
      %p42 = por %p40, %p41
      %p43 = scmp.ne.s32.totalorder %s32, %s35
      %p44 = scmp.eq.s32.totalorder %s27, 3
      %p45 = por %p43, %p44
      %p46 = scmp.ne.s32.totalorder %s35, %s36
      %p47 = scmp.eq.s32.totalorder %s27, 0
      %p48 = por %p46, %p47
      %p49 = scmp.ne.s32.totalorder %s35, %s36
      %p50 = scmp.eq.s32.totalorder %s28, 3
      %p51 = por %p49, %p50
      %p53 = scmp.ne.s32.totalorder %s36, %s52
      %p54 = scmp.eq.s32.totalorder %s28, 0
      %p55 = por %p53, %p54
      %s56 = ssub.s32 %s22, %s29
      %p57 = scmp.eq.s32.totalorder %s56, 0
      %s59 = sadd.s32 %s58, 1
      %s60 = scalar_select %p57, %s58, %s59
      %p63 = pneg %p57
      %p64 = scmp.eq.s32.totalorder %s22, 3
      %p65 = por %p63, %p64
      %p66 = scmp.ne.s32.totalorder %s58, %s61
      %p67 = scmp.eq.s32.totalorder %s22, 0
      %p68 = por %p66, %p67
      %p69 = scmp.ne.s32.totalorder %s58, %s61
      %p70 = scmp.eq.s32.totalorder %s27, 3
      %p71 = por %p69, %p70
      %p72 = scmp.ne.s32.totalorder %s61, %s62
      %p73 = scmp.eq.s32.totalorder %s27, 0
      %p74 = por %p72, %p73
      %p75 = scmp.ne.s32.totalorder %s61, %s62
      %p76 = scmp.eq.s32.totalorder %s28, 3
      %p77 = por %p75, %p76
      %p79 = scmp.ne.s32.totalorder %s62, %s78
      %p80 = scmp.eq.s32.totalorder %s28, 0
      %p81 = por %p79, %p80
      %s83 = sadd.s32 %s82, 1
      %p86 = scmp.eq.s32.totalorder %s22, 3
      %p87 = scmp.ne.s32.totalorder %s82, %s84
      %p88 = scmp.eq.s32.totalorder %s22, 0
      %p89 = por %p87, %p88
      %p90 = scmp.ne.s32.totalorder %s82, %s84
      %p91 = scmp.eq.s32.totalorder %s27, 3
      %p92 = por %p90, %p91
      %p93 = scmp.ne.s32.totalorder %s84, %s85
      %p94 = scmp.eq.s32.totalorder %s27, 0
      %p95 = por %p93, %p94
      %p96 = scmp.ne.s32.totalorder %s84, %s85
      %p97 = scmp.eq.s32.totalorder %s28, 3
      %p98 = por %p96, %p97
      %p100 = scmp.ne.s32.totalorder %s85, %s99
      %p101 = scmp.eq.s32.totalorder %s28, 0
      %p102 = por %p100, %p101
      %s104 = sadd.s32 %s103, 1
      %p107 = scmp.eq.s32.totalorder %s22, 3
      %p108 = scmp.ne.s32.totalorder %s103, %s105
      %p109 = scmp.eq.s32.totalorder %s22, 0
      %p110 = por %p108, %p109
      %p111 = scmp.ne.s32.totalorder %s103, %s105
      %p112 = scmp.eq.s32.totalorder %s27, 3
      %p113 = por %p111, %p112
      %p114 = scmp.ne.s32.totalorder %s105, %s106
      %p115 = scmp.eq.s32.totalorder %s27, 0
      %p116 = por %p114, %p115
      %p117 = scmp.ne.s32.totalorder %s105, %s106
      %p118 = scmp.eq.s32.totalorder %s28, 3
      %p119 = por %p117, %p118
      %p121 = scmp.ne.s32.totalorder %s106, %s120
      %p122 = scmp.eq.s32.totalorder %s28, 0
      %p123 = por %p121, %p122
      %s125 = sadd.s32 %s124, 1
      %p128 = scmp.eq.s32.totalorder %s22, 3
      %p129 = scmp.ne.s32.totalorder %s124, %s126
      %p130 = scmp.eq.s32.totalorder %s22, 0
      %p131 = por %p129, %p130
      %p132 = scmp.ne.s32.totalorder %s124, %s126
      %p133 = scmp.eq.s32.totalorder %s27, 3
      %p134 = por %p132, %p133
      %p135 = scmp.ne.s32.totalorder %s126, %s127
      %p136 = scmp.eq.s32.totalorder %s27, 0
      %p137 = por %p135, %p136
      %p138 = scmp.ne.s32.totalorder %s126, %s127
      %p139 = scmp.eq.s32.totalorder %s28, 3
      %p140 = por %p138, %p139
      %p142 = scmp.ne.s32.totalorder %s127, %s141
      %p143 = scmp.eq.s32.totalorder %s28, 0
      %p144 = por %p142, %p143
      %s146 = sadd.s32 %s145, 1
      %p149 = scmp.eq.s32.totalorder %s22, 3
      %p150 = scmp.ne.s32.totalorder %s145, %s147
      %p151 = scmp.eq.s32.totalorder %s22, 0
      %p152 = por %p150, %p151
      %p153 = scmp.ne.s32.totalorder %s145, %s147
      %p154 = scmp.eq.s32.totalorder %s27, 3
      %p155 = por %p153, %p154
      %p156 = scmp.ne.s32.totalorder %s147, %s148
      %p157 = scmp.eq.s32.totalorder %s27, 0
      %p158 = por %p156, %p157
      %p159 = scmp.ne.s32.totalorder %s147, %s148
      %p160 = scmp.eq.s32.totalorder %s28, 3
      %p161 = por %p159, %p160
      %p163 = scmp.ne.s32.totalorder %s148, %s162
      %p164 = scmp.eq.s32.totalorder %s28, 0
      %p165 = por %p163, %p164
      %s166 = ssub.s32 %s22, %s29
      %p167 = scmp.eq.s32.totalorder %s166, 0
      %s169 = sadd.s32 %s168, 1
      %s170 = scalar_select %p167, %s168, %s169
      %p173 = pneg %p167
      %p174 = scmp.eq.s32.totalorder %s22, 3
      %p175 = por %p173, %p174
      %p176 = scmp.ne.s32.totalorder %s168, %s171
      %p177 = scmp.eq.s32.totalorder %s22, 0
      %p178 = por %p176, %p177
      %p179 = scmp.ne.s32.totalorder %s168, %s171
      %p180 = scmp.eq.s32.totalorder %s27, 3
      %p181 = por %p179, %p180
      %p182 = scmp.ne.s32.totalorder %s171, %s172
      %p183 = scmp.eq.s32.totalorder %s27, 0
      %p184 = por %p182, %p183
      %p185 = scmp.ne.s32.totalorder %s171, %s172
      %p186 = scmp.eq.s32.totalorder %s28, 3
      %p187 = por %p185, %p186
      %p189 = scmp.ne.s32.totalorder %s172, %s188
      %p190 = scmp.eq.s32.totalorder %s28, 0
      %p191 = por %p189, %p190
      %p192 = scmp.le.s32.totalorder 1, %s22
      %p193 = scmp.lt.s32.totalorder %s22, 5
      %p194 = pnand %p192, %p193
      %p195 = pneg %p194
      // Predicated region
      $region9: #{tpu_custom_call.1} parent=5 // pred_check
        _
      $region10: #{tpu_custom_call.1} parent=5 // pred_check_branch
        %197 = sbr.rel (%p194) target = $region12
      $region11: #{tpu_custom_call.1} parent=5 // pred_region
        %s198 = ssub.s32 %s22, 1
        // Predicated region
        $region13: #{tpu_custom_call.1} parent=11 // pred_check
          %p199 = pneg %p95
        $region14: #{tpu_custom_call.1} parent=11 // pred_check_branch
          %201 = sbr.rel (%p199) target = $region16
        $region15: #{tpu_custom_call.1} parent=11 // pred_region
          %203 = vsyncadd [#allocation6], 0
          %s204 = sshll.u32 %s2, 4
          %s205 = int_to_ptr.hbm [resolvable:$true] %s204
          %s206 = sshll.u32 [#allocation7], 4
          %s207 = int_to_ptr.vmem [resolvable:$true] %s206
          %212 = dma.hbm_to_vmem [thread:$0]  %s205, 1024, %s207, [#allocation6], 128, 128, 8
        $region16: #{tpu_custom_call.1} parent=11 // pred_fallthru
          _
        // Predicated region
        $region17: #{tpu_custom_call.1} parent=11 // pred_check
          %p213 = pneg %p116
        $region18: #{tpu_custom_call.1} parent=11 // pred_check_branch
          %215 = sbr.rel (%p213) target = $region20
        $region19: #{tpu_custom_call.1} parent=11 // pred_region
          %217 = vsyncadd [#allocation9], 0
          %s218 = sshll.u32 %s3, 4
          %s219 = int_to_ptr.hbm [resolvable:$true] %s218
          %s220 = sshll.u32 [#allocation8], 4
          %s221 = int_to_ptr.vmem [resolvable:$true] %s220
          %226 = dma.hbm_to_vmem [thread:$0]  %s219, 1024, %s221, [#allocation9], 128, 128, 8
        $region20: #{tpu_custom_call.1} parent=11 // pred_fallthru
          _
        // Predicated region
        $region21: #{tpu_custom_call.1} parent=11 // pred_check
          %p227 = pneg %p137
        $region22: #{tpu_custom_call.1} parent=11 // pred_check_branch
          %229 = sbr.rel (%p227) target = $region24
        $region23: #{tpu_custom_call.1} parent=11 // pred_region
          _
        $region24: #{tpu_custom_call.1} parent=11 // pred_fallthru
          _
        // Predicated region
        $region25: #{tpu_custom_call.1} parent=11 // pred_check
          %p230 = pneg %p158
        $region26: #{tpu_custom_call.1} parent=11 // pred_check_branch
          %232 = sbr.rel (%p230) target = $region28
        $region27: #{tpu_custom_call.1} parent=11 // pred_region
          _
        $region28: #{tpu_custom_call.1} parent=11 // pred_fallthru
          _
      $region12: #{tpu_custom_call.1} parent=5 // pred_fallthru
        _
      %p233 = scmp.lt.s32.totalorder %s22, 4
      // Predicated region
      $region29: #{tpu_custom_call.1} parent=5 // pred_check
        %p234 = pneg %p233
      $region30: #{tpu_custom_call.1} parent=5 // pred_check_branch
        %236 = sbr.rel (%p234) target = $region32
      $region31: #{tpu_custom_call.1} parent=5 // pred_region
        // Predicated region
        $region33: #{tpu_custom_call.1} parent=31 // pred_check
          %p237 = pneg %p42
        $region34: #{tpu_custom_call.1} parent=31 // pred_check_branch
          %239 = sbr.rel (%p237) target = $region36
        $region35: #{tpu_custom_call.1} parent=31 // pred_region
          %s240 = sand.u32 %s32, 1
          %s241 = scalar_lea.sflag [#allocation3], %s240
          %s242 = sand.u32 %s32, 1
          %s243 = smul.addr %s242, 32
          %s244 = scalar_lea.vmem [#allocation2], %s243
          %s245 = smul.u32 4, %s22
          %247 = vsyncadd %s241, 0
          %s248 = smul.addr %s245, 2
          %s249 = smul.addr %s248, 8
          %s250 = scalar_lea.hbm %s0, %s249
          %s251 = sshll.u32 %s250, 4
          %s252 = int_to_ptr.hbm [resolvable:$true] %s251
          %s253 = sshll.u32 %s244, 4
          %s254 = int_to_ptr.vmem [resolvable:$true] %s253
          %259 = dma.hbm_to_vmem [thread:$0]  %s252, 512, %s254, %s241, 256, 128, 8
        $region36: #{tpu_custom_call.1} parent=31 // pred_fallthru
          _
        // Predicated region
        $region37: #{tpu_custom_call.1} parent=31 // pred_check
          %p260 = pneg %p68
        $region38: #{tpu_custom_call.1} parent=31 // pred_check_branch
          %262 = sbr.rel (%p260) target = $region40
        $region39: #{tpu_custom_call.1} parent=31 // pred_region
          %s263 = sand.u32 %s22, 1
          %s264 = scalar_lea.sflag [#allocation6], %s263
          %s265 = sand.u32 %s58, 1
          %s266 = smul.addr %s265, 32
          %s267 = scalar_lea.vmem [#allocation5], %s266
          %s268 = smul.u32 4, %s22
          %270 = vsyncadd %s264, 0
          %s271 = smul.addr %s268, 2
          %s272 = sadd.s32 1, %s271
          %s273 = smul.addr %s272, 8
          %s274 = scalar_lea.hbm %s1, %s273
          %s275 = sshll.u32 %s274, 4
          %s276 = int_to_ptr.hbm [resolvable:$true] %s275
          %s277 = sshll.u32 %s267, 4
          %s278 = int_to_ptr.vmem [resolvable:$true] %s277
          %283 = dma.hbm_to_vmem [thread:$0]  %s276, 512, %s278, %s264, 256, 128, 8
        $region40: #{tpu_custom_call.1} parent=31 // pred_fallthru
          _
      $region32: #{tpu_custom_call.1} parent=5 // pred_fallthru
        _
      %p284 = scmp.le.s32.totalorder 1, %s22
      %p285 = scmp.lt.s32.totalorder %s22, 5
      %p286 = pnand %p284, %p285
      %p287 = pneg %p286
      // Predicated region
      $region41: #{tpu_custom_call.1} parent=5 // pred_check
        _
      $region42: #{tpu_custom_call.1} parent=5 // pred_check_branch
        %289 = sbr.rel (%p286) target = $region44
      $region43: #{tpu_custom_call.1} parent=5 // pred_region
        %s290 = ssub.s32 %s22, 1
        %s291 = sand.u32 %s35, 1
        %s292 = scalar_lea.sflag [#allocation3], %s291
        %s293 = sand.u32 %s35, 1
        %s294 = smul.addr %s293, 32
        %s295 = scalar_lea.vmem [#allocation2], %s294
        // Predicated region
        $region45: #{tpu_custom_call.1} parent=43 // pred_check
          %p296 = pneg %p48
        $region46: #{tpu_custom_call.1} parent=43 // pred_check_branch
          %298 = sbr.rel (%p296) target = $region48
        $region47: #{tpu_custom_call.1} parent=43 // pred_region
          %300 = dma.done %s292, 512
        $region48: #{tpu_custom_call.1} parent=43 // pred_fallthru
          _
        %s301 = sand.u32 %s27, 1
        %s302 = scalar_lea.sflag [#allocation6], %s301
        %s303 = sand.u32 %s61, 1
        %s304 = smul.addr %s303, 32
        %s305 = scalar_lea.vmem [#allocation5], %s304
        // Predicated region
        $region49: #{tpu_custom_call.1} parent=43 // pred_check
          %p306 = pneg %p74
        $region50: #{tpu_custom_call.1} parent=43 // pred_check_branch
          %308 = sbr.rel (%p306) target = $region52
        $region51: #{tpu_custom_call.1} parent=43 // pred_region
          %310 = dma.done %s302, 512
        $region52: #{tpu_custom_call.1} parent=43 // pred_fallthru
          _
        // Predicated region
        $region53: #{tpu_custom_call.1} parent=43 // pred_check
          %p311 = pneg %p95
        $region54: #{tpu_custom_call.1} parent=43 // pred_check_branch
          %313 = sbr.rel (%p311) target = $region56
        $region55: #{tpu_custom_call.1} parent=43 // pred_region
          %315 = dma.done [#allocation6], 1024
        $region56: #{tpu_custom_call.1} parent=43 // pred_fallthru
          _
        // Predicated region
        $region57: #{tpu_custom_call.1} parent=43 // pred_check
          %p316 = pneg %p116
        $region58: #{tpu_custom_call.1} parent=43 // pred_check_branch
          %318 = sbr.rel (%p316) target = $region60
        $region59: #{tpu_custom_call.1} parent=43 // pred_region
          %320 = dma.done [#allocation9], 1024
        $region60: #{tpu_custom_call.1} parent=43 // pred_fallthru
          _
        %s321 = sand.u32 %s35, 1
        %s322 = scalar_lea.sflag [#allocation3], %s321
        %s323 = sand.u32 %s35, 1
        %s324 = smul.addr %s323, 32
        %s325 = scalar_lea.vmem [#allocation2], %s324
        %p326 = pneg %p48
        %p327 = pneg %p45
        %s328 = sand.u32 %s27, 1
        %s329 = scalar_lea.sflag [#allocation6], %s328
        %s330 = sand.u32 %s61, 1
        %s331 = smul.addr %s330, 32
        %s332 = scalar_lea.vmem [#allocation5], %s331
        %p333 = pneg %p74
        %p334 = pneg %p71
        %p335 = pneg %p95
        %p336 = pneg %p92
        %p337 = pneg %p116
        %p338 = pneg %p113
        %p339 = pneg %p137
        %p340 = pneg %p134
        %p341 = pneg %p158
        %p342 = pneg %p155
        %p343 = pneg %p184
        %p344 = pneg %p181
        %s345 = sand.u32 %s171, 1
        %s346 = scalar_lea.sflag [#allocation4], %s345
        %s347 = sand.u32 %s171, 1
        %s348 = smul.addr %s347, 32
        %s349 = scalar_lea.vmem [#allocation10], %s348
        %s350 = smul.u32 4, %s27
        %s351 = smul.u32 4, %s27
        %s352 = smul.u32 4, %s27
        %v353 = vld [vmem:[%s295] sm:$0xff]
        %v354 = vld [vmem:[%s295 + $0x8] sm:$0xff]
        %v355 = vld [vmem:[%s295 + $0x10] sm:$0xff]
        %v356 = vld [vmem:[%s295 + $0x18] sm:$0xff]
        %v357 = vld [vmem:[#allocation7] sm:$0xff]
        %v358 = vld [vmem:[#allocation7 + $0x8] sm:$0xff]
        %v359 = vld [vmem:[#allocation7 + $0x10] sm:$0xff]
        %v360 = vld [vmem:[#allocation7 + $0x18] sm:$0xff]
        %v361 = vld [vmem:[#allocation7 + $0x20] sm:$0xff]
        %v362 = vld [vmem:[#allocation7 + $0x28] sm:$0xff]
        %v363 = vld [vmem:[#allocation7 + $0x30] sm:$0xff]
        %v364 = vld [vmem:[#allocation7 + $0x38] sm:$0xff]
        %v365 = vld [vmem:[%s305] sm:$0xff]
        %v366 = vld [vmem:[%s305 + $0x8] sm:$0xff]
        %v367 = vld [vmem:[%s305 + $0x10] sm:$0xff]
        %v368 = vld [vmem:[%s305 + $0x18] sm:$0xff]
        %v369 = vld [vmem:[#allocation8] sm:$0xff]
        %v370 = vld [vmem:[#allocation8 + $0x8] sm:$0xff]
        %v371 = vld [vmem:[#allocation8 + $0x10] sm:$0xff]
        %v372 = vld [vmem:[#allocation8 + $0x18] sm:$0xff]
        %v373 = vld [vmem:[#allocation8 + $0x20] sm:$0xff]
        %v374 = vld [vmem:[#allocation8 + $0x28] sm:$0xff]
        %v375 = vld [vmem:[#allocation8 + $0x30] sm:$0xff]
        %v376 = vld [vmem:[#allocation8 + $0x38] sm:$0xff]
        %vm377 = vcmask 523264
        %v379 = vsel %vm377, %v365, 0
        %v382 = vsel %vm377, %v366, 0
        %v385 = vsel %vm377, %v367, 0
        %v388 = vsel %vm377, %v368, 0
        %390 = vmatpush.msra.mxu0 0.0
        %391 = vmatpush.msra.mxu0 0.0
        %392 = vmatpush.msra.mxu0 0.0
        %393 = vmatpush.msra.mxu0 0.0
        %394 = vmatpush.msra.mxu0 0.0
        %395 = vmatpush.msra.mxu0 0.0
        %396 = vmatpush.msra.mxu0 0.0
        %397 = vmatpush.msra.mxu0 0.0
        %398 = vmatpush.msra.mxu0 %v376
        %399 = vmatpush.msra.mxu0 %v375
        %400 = vmatpush.msra.mxu0 %v374
        %401 = vmatpush.msra.mxu0 %v373
        %402 = vmatpush.msra.mxu0 %v372
        %403 = vmatpush.msra.mxu0 %v371
        %404 = vmatpush.msra.mxu0 %v370
        %405 = vmatpush.msra.mxu0 %v369
        %406 = vmatmul.f32.gmra.mxu0 %v379
        %v407 = vpop.f32.mrf.mxu0
        %v408 = vadd.f32 0.0, %v407
        %409 = vmatmul.f32.gmra.mxu0 %v382
        %v410 = vpop.f32.mrf.mxu0
        %v411 = vadd.f32 0.0, %v410
        %412 = vmatmul.f32.gmra.mxu0 %v385
        %v413 = vpop.f32.mrf.mxu0
        %v414 = vadd.f32 0.0, %v413
        %415 = vmatmul.f32.gmra.mxu0 %v388
        %v416 = vpop.f32.mrf.mxu0
        %v417 = vadd.f32 0.0, %v416
        %418 = vdwg.mxu0
        %v420 = vsel %vm377, %v353, 0
        %v423 = vsel %vm377, %v354, 0
        %v426 = vsel %vm377, %v355, 0
        %v429 = vsel %vm377, %v356, 0
        %431 = vmatpush.msra.mxu0 0.0
        %432 = vmatpush.msra.mxu0 0.0
        %433 = vmatpush.msra.mxu0 0.0
        %434 = vmatpush.msra.mxu0 0.0
        %435 = vmatpush.msra.mxu0 0.0
        %436 = vmatpush.msra.mxu0 0.0
        %437 = vmatpush.msra.mxu0 0.0
        %438 = vmatpush.msra.mxu0 0.0
        %439 = vmatpush.msra.mxu0 %v364
        %440 = vmatpush.msra.mxu0 %v363
        %441 = vmatpush.msra.mxu0 %v362
        %442 = vmatpush.msra.mxu0 %v361
        %443 = vmatpush.msra.mxu0 %v360
        %444 = vmatpush.msra.mxu0 %v359
        %445 = vmatpush.msra.mxu0 %v358
        %446 = vmatpush.msra.mxu0 %v357
        %447 = vmatmul.f32.gmra.mxu0 %v420
        %v448 = vpop.f32.mrf.mxu0
        %v449 = vadd.f32 %v408, %v448
        %450 = vmatmul.f32.gmra.mxu0 %v423
        %v451 = vpop.f32.mrf.mxu0
        %v452 = vadd.f32 %v411, %v451
        %453 = vmatmul.f32.gmra.mxu0 %v426
        %v454 = vpop.f32.mrf.mxu0
        %v455 = vadd.f32 %v414, %v454
        %456 = vmatmul.f32.gmra.mxu0 %v429
        %v457 = vpop.f32.mrf.mxu0
        %v458 = vadd.f32 %v417, %v457
        %459 = vdwg.mxu0
        %v460 = vld [vmem:[%s4] sm:$0x1]
        %v461 = vld [vmem:[%s5] sm:$0x1]
        %v462 = vsel %vm377, %v449, 0.0
        %463 = vadd.xlane.f32.xlu0 %v462
        %v464 = vpop.xlane.xlu0 %463
        %v465 = vsel %vm377, %v452, 0.0
        %466 = vadd.xlane.f32.xlu0 %v465
        %v467 = vpop.xlane.xlu0 %466
        %v468 = vsel %vm377, %v455, 0.0
        %469 = vadd.xlane.f32.xlu0 %v468
        %v470 = vpop.xlane.xlu0 %469
        %v471 = vsel %vm377, %v458, 0.0
        %472 = vadd.xlane.f32.xlu0 %v471
        %v473 = vpop.xlane.xlu0 %472
        %v474 = vmul.f32 %v449, %v449
        %v475 = vmul.f32 %v452, %v452
        %v476 = vmul.f32 %v455, %v455
        %v477 = vmul.f32 %v458, %v458
        %v478 = vsel %vm377, %v474, 0.0
        %479 = vadd.xlane.f32.xlu0 %v478
        %v480 = vpop.xlane.xlu0 %479
        %v481 = vsel %vm377, %v475, 0.0
        %482 = vadd.xlane.f32.xlu0 %v481
        %v483 = vpop.xlane.xlu0 %482
        %v484 = vsel %vm377, %v476, 0.0
        %485 = vadd.xlane.f32.xlu0 %v484
        %v486 = vpop.xlane.xlu0 %485
        %v487 = vsel %vm377, %v477, 0.0
        %488 = vadd.xlane.f32.xlu0 %v487
        %v489 = vpop.xlane.xlu0 %488
        %v490 = vmul.f32 %v464, 0.015625
        %v491 = vmul.f32 %v467, 0.015625
        %v492 = vmul.f32 %v470, 0.015625
        %v493 = vmul.f32 %v473, 0.015625
        %v494 = vmul.f32 %v480, 0.015625
        %v495 = vmul.f32 %v483, 0.015625
        %v496 = vmul.f32 %v486, 0.015625
        %v497 = vmul.f32 %v489, 0.015625
        %v498 = vmul.f32 %v490, %v490
        %v499 = vmul.f32 %v491, %v491
        %v500 = vmul.f32 %v492, %v492
        %v501 = vmul.f32 %v493, %v493
        %v502 = vsub.f32 %v494, %v498
        %v503 = vsub.f32 %v495, %v499
        %v504 = vsub.f32 %v496, %v500
        %v505 = vsub.f32 %v497, %v501
        %v506 = vmax.f32 %v502, 0.0
        %v507 = vmax.f32 %v503, 0.0
        %v508 = vmax.f32 %v504, 0.0
        %v509 = vmax.f32 %v505, 0.0
        %v510 = vsub.f32 %v449, %v490
        %v511 = vsub.f32 %v452, %v491
        %v512 = vsub.f32 %v455, %v492
        %v513 = vsub.f32 %v458, %v493
        %v514 = vadd.f32 %v506, 1e-05
        %v515 = vadd.f32 %v507, 1e-05
        %v516 = vadd.f32 %v508, 1e-05
        %v517 = vadd.f32 %v509, 1e-05
        %v518 = vrsqrt.pop %v514
        %v519 = vmul.f32 %v518, %v514
        %v520 = vmul.f32 %v519, %v518
        %v521 = vmul.f32 0.5, %v520
        %v522 = vsub.f32 1.5, %v521
        %v523 = vmul.f32 %v518, %v522
        %vm524 = vweird.f32 %v514
        %vm525 = vweird.f32 %v518
        %vm526 = vmor %vm524, %vm525
        %v527 = vsel %vm526, %v518, %v523
        %v528 = vrsqrt.pop %v515
        %v529 = vmul.f32 %v528, %v515
        %v530 = vmul.f32 %v529, %v528
        %v531 = vmul.f32 0.5, %v530
        %v532 = vsub.f32 1.5, %v531
        %v533 = vmul.f32 %v528, %v532
        %vm534 = vweird.f32 %v515
        %vm535 = vweird.f32 %v528
        %vm536 = vmor %vm534, %vm535
        %v537 = vsel %vm536, %v528, %v533
        %v538 = vrsqrt.pop %v516
        %v539 = vmul.f32 %v538, %v516
        %v540 = vmul.f32 %v539, %v538
        %v541 = vmul.f32 0.5, %v540
        %v542 = vsub.f32 1.5, %v541
        %v543 = vmul.f32 %v538, %v542
        %vm544 = vweird.f32 %v516
        %vm545 = vweird.f32 %v538
        %vm546 = vmor %vm544, %vm545
        %v547 = vsel %vm546, %v538, %v543
        %v548 = vrsqrt.pop %v517
        %v549 = vmul.f32 %v548, %v517
        %v550 = vmul.f32 %v549, %v548
        %v551 = vmul.f32 0.5, %v550
        %v552 = vsub.f32 1.5, %v551
        %v553 = vmul.f32 %v548, %v552
        %vm554 = vweird.f32 %v517
        %vm555 = vweird.f32 %v548
        %vm556 = vmor %vm554, %vm555
        %v557 = vsel %vm556, %v548, %v553
        %v558 = vmul.f32 %v510, %v527
        %v559 = vmul.f32 %v511, %v537
        %v560 = vmul.f32 %v512, %v547
        %v561 = vmul.f32 %v513, %v557
        %v563 = vperm.slane %v460, 0
        %v565 = vmul.f32 %v558, %v563
        %v566 = vmul.f32 %v559, %v563
        %v567 = vmul.f32 %v560, %v563
        %v568 = vmul.f32 %v561, %v563
        %v570 = vperm.slane %v461, 0
        %v572 = vadd.f32 %v565, %v570
        %v573 = vadd.f32 %v566, %v570
        %v574 = vadd.f32 %v567, %v570
        %v575 = vadd.f32 %v568, %v570
        %576 = vst.msk [vmem:[%s349] sm:$0xff] %vm377, %v572
        %577 = vst.msk [vmem:[%s349 + $0x8] sm:$0xff] %vm377, %v573
        %578 = vst.msk [vmem:[%s349 + $0x10] sm:$0xff] %vm377, %v574
        %579 = vst.msk [vmem:[%s349 + $0x18] sm:$0xff] %vm377, %v575
        %s580 = sand.u32 %s171, 1
        %s581 = scalar_lea.sflag [#allocation4], %s580
        %s582 = sand.u32 %s171, 1
        %s583 = smul.addr %s582, 32
        %s584 = scalar_lea.vmem [#allocation10], %s583
        // Predicated region
        $region61: #{tpu_custom_call.1} parent=43 // pred_check
          %p585 = pneg %p181
        $region62: #{tpu_custom_call.1} parent=43 // pred_check_branch
          %587 = sbr.rel (%p585) target = $region64
        $region63: #{tpu_custom_call.1} parent=43 // pred_region
          %s588 = smul.u32 4, %s27
          %590 = vsyncadd %s581, 0
          %s591 = smul.addr %s588, 8
          %s592 = scalar_lea.hbm %s6, %s591
          %s593 = sshll.u32 %s584, 4
          %s594 = int_to_ptr.vmem [resolvable:$true] %s593
          %s595 = sshll.u32 %s592, 4
          %s596 = int_to_ptr.hbm [resolvable:$true] %s595
          %601 = dma.vmem_to_hbm [thread:$0]  %s594, 512, %s596, %s581, 128, 128, 8
        $region64: #{tpu_custom_call.1} parent=43 // pred_fallthru
          _
      $region44: #{tpu_custom_call.1} parent=5 // pred_fallthru
        _
      %p602 = scmp.le.s32.totalorder 2, %s22
      // Predicated region
      $region65: #{tpu_custom_call.1} parent=5 // pred_check
        %p603 = pneg %p602
      $region66: #{tpu_custom_call.1} parent=5 // pred_check_branch
        %605 = sbr.rel (%p603) target = $region68
      $region67: #{tpu_custom_call.1} parent=5 // pred_region
        %s606 = ssub.s32 %s22, 2
        // Predicated region
        $region69: #{tpu_custom_call.1} parent=67 // pred_check
          %p607 = pneg %p187
        $region70: #{tpu_custom_call.1} parent=67 // pred_check_branch
          %609 = sbr.rel (%p607) target = $region72
        $region71: #{tpu_custom_call.1} parent=67 // pred_region
          %s610 = sand.u32 %s172, 1
          %s611 = scalar_lea.sflag [#allocation4], %s610
          %s612 = sand.u32 %s172, 1
          %s613 = smul.addr %s612, 32
          %s614 = scalar_lea.vmem [#allocation10], %s613
          %616 = dma.done %s611, 512
        $region72: #{tpu_custom_call.1} parent=67 // pred_fallthru
          _
      $region68: #{tpu_custom_call.1} parent=5 // pred_fallthru
        _
    $region6: #{tpu_custom_call.1} parent=1 // loop_footer
      %s26 = sadd.s32 1, %s22
    $region7: #{tpu_custom_call.1} parent=1 // loop_footer_branch
      %21 = sbr.rel target = $region3
    $region8: #{tpu_custom_call.1} parent=1 // loop_exit
      _
    %617 = vsyncpa [#allocation3], 1
    %s618 = scalar_lea.sflag [#allocation3], 1
    %619 = vsyncpa %s618, 1
    %620 = vsyncpa [#allocation6], 1
    %s621 = scalar_lea.sflag [#allocation6], 1
    %622 = vsyncpa %s621, 1
    %623 = vsyncpa [#allocation9], 1
    %624 = vsyncpa [#allocation4], 1
    %s625 = scalar_lea.sflag [#allocation4], 1
    %626 = vsyncpa %s625, 1

// kernel: tpu_custom_call.1
$region0: #{tpu_custom_call.1}
  #allocation0 [shape = 'u32[]', space=smem, size = 0x4, offset = 0x4, fixed_abs, tag = 'smem constant byte address 0x4 - core index']
  #allocation1 [shape = 'u32[72,128]{1,0:T(1,128)}', space=vmem, size = 0x9000, scoped, tag = 'internal scratch']
  %s0 = inlined_call_operand.hbm [shape: f32[16,2,8,64], index: 0, kind: input, shape index: {}]
  %s1 = inlined_call_operand.hbm [shape: f32[16,2,8,64], index: 1, kind: input, shape index: {}]
  %s2 = inlined_call_operand.hbm [shape: f32[64,64], index: 2, kind: input, shape index: {}]
  %s3 = inlined_call_operand.hbm [shape: f32[64,64], index: 3, kind: input, shape index: {}]
  %s4 = inlined_call_operand.vmem [shape: f32[1,64], index: 4, kind: input, shape index: {}]
  %s5 = inlined_call_operand.vmem [shape: f32[1,64], index: 5, kind: input, shape index: {}]
  %s6 = inlined_call_operand.hbm [shape: f32[16,8,64], index: 6, kind: output, shape index: {}]
  %s7 = sld [smem:[#allocation0]]
  $region73: #{tpu_custom_call.1} parent=0
    _
  %s9 = ssub.s32 1, %s7
  %s10 = scalar_select 0, %s9, %s7
  $region1: #{tpu_custom_call.1} parent=0
    #allocation2 [shape = 'u8[32768]{0}', space=vmem, size = 0x8000, scoped, tag = 'input window, operand 0']
    #allocation3 [shape = 's32[2]{0}', space=sflag, size = 0x8, scoped, tag = 'scoped memory for tpu_custom_call.1']
    #allocation4 [shape = 's32[2]{0}', space=sflag, size = 0x8, scoped, tag = 'scoped memory for tpu_custom_call.1']
    #allocation5 [shape = 'u8[32768]{0}', space=vmem, size = 0x8000, scoped, tag = 'input window, operand 1']
    #allocation6 [shape = 's32[2]{0}', space=sflag, size = 0x8, scoped, tag = 'scoped memory for tpu_custom_call.1']
    #allocation7 [shape = 'u8[32768]{0}', space=vmem, size = 0x8000, scoped, tag = 'input window, operand 2, single buffered']
    #allocation8 [shape = 'u8[32768]{0}', space=vmem, size = 0x8000, scoped, tag = 'input window, operand 3, single buffered']
    #allocation9 [shape = 's32[1]{0}', space=sflag, size = 0x4, scoped, tag = 'scoped memory for tpu_custom_call.1']
    #allocation10 [shape = 'u8[32768]{0}', space=vmem, size = 0x8000, scoped, tag = 'output window, operand 0']
    %11 = vsyncpa [#allocation3], 0
    %s12 = scalar_lea.sflag [#allocation3], 1
    %13 = vsyncpa %s12, 0
    %14 = vsyncpa [#allocation6], 0
    %s15 = scalar_lea.sflag [#allocation6], 1
    %16 = vsyncpa %s15, 0
    %17 = vsyncpa [#allocation9], 0
    %18 = vsyncpa [#allocation4], 0
    %s19 = scalar_lea.sflag [#allocation4], 1
    %20 = vsyncpa %s19, 0
    loop: start=0, step=1, limit=6
    $region2: #{tpu_custom_call.1} parent=1 // loop_pre_header
      _
    $region3: #{tpu_custom_call.1} parent=1 // loop_header
      %s22 = sphi 0, %s26
      %p23 = scmp.ge.s32.totalorder %s22, 6
      %s32 = sphi 0, %s34
      %s35 = sphi 0, %s32
      %s36 = sphi 0, %s35
      %s52 = sphi 0, %s36
      %s58 = sphi 0, %s60
      %s61 = sphi 0, %s58
      %s62 = sphi 0, %s61
      %s78 = sphi 0, %s62
      %s82 = sphi 0, %s82
      %s84 = sphi 0, %s82
      %s85 = sphi 0, %s84
      %s99 = sphi 0, %s85
      %s103 = sphi 0, %s103
      %s105 = sphi 0, %s103
      %s106 = sphi 0, %s105
      %s120 = sphi 0, %s106
      %s124 = sphi 0, %s124
      %s126 = sphi 0, %s124
      %s127 = sphi 0, %s126
      %s141 = sphi 0, %s127
      %s145 = sphi 0, %s145
      %s147 = sphi 0, %s145
      %s148 = sphi 0, %s147
      %s162 = sphi 0, %s148
      %s168 = sphi 0, %s170
      %s171 = sphi 0, %s168
      %s172 = sphi 0, %s171
      %s188 = sphi 0, %s172
    $region4: #{tpu_custom_call.1} parent=1 // loop_header_branch
      %25 = sbr.rel (%p23) target = $region8
    $region5: #{tpu_custom_call.1} parent=1 // loop_body
      %s27 = ssub.s32 %s22, 1
      %s28 = ssub.s32 %s22, 2
      %s29 = sadd.s32 %s22, 1
      %s30 = ssub.s32 %s22, %s29
      %p31 = scmp.eq.s32.totalorder %s30, 0
      %s33 = sadd.s32 %s32, 1
      %s34 = scalar_select %p31, %s32, %s33
      %p37 = pneg %p31
      %p38 = scmp.eq.s32.totalorder %s22, 3
      %p39 = por %p37, %p38
      %p40 = scmp.ne.s32.totalorder %s32, %s35
      %p41 = scmp.eq.s32.totalorder %s22, 0
      %p42 = por %p40, %p41
      %p43 = scmp.ne.s32.totalorder %s32, %s35
      %p44 = scmp.eq.s32.totalorder %s27, 3
      %p45 = por %p43, %p44
      %p46 = scmp.ne.s32.totalorder %s35, %s36
      %p47 = scmp.eq.s32.totalorder %s27, 0
      %p48 = por %p46, %p47
      %p49 = scmp.ne.s32.totalorder %s35, %s36
      %p50 = scmp.eq.s32.totalorder %s28, 3
      %p51 = por %p49, %p50
      %p53 = scmp.ne.s32.totalorder %s36, %s52
      %p54 = scmp.eq.s32.totalorder %s28, 0
      %p55 = por %p53, %p54
      %s56 = ssub.s32 %s22, %s29
      %p57 = scmp.eq.s32.totalorder %s56, 0
      %s59 = sadd.s32 %s58, 1
      %s60 = scalar_select %p57, %s58, %s59
      %p63 = pneg %p57
      %p64 = scmp.eq.s32.totalorder %s22, 3
      %p65 = por %p63, %p64
      %p66 = scmp.ne.s32.totalorder %s58, %s61
      %p67 = scmp.eq.s32.totalorder %s22, 0
      %p68 = por %p66, %p67
      %p69 = scmp.ne.s32.totalorder %s58, %s61
      %p70 = scmp.eq.s32.totalorder %s27, 3
      %p71 = por %p69, %p70
      %p72 = scmp.ne.s32.totalorder %s61, %s62
      %p73 = scmp.eq.s32.totalorder %s27, 0
      %p74 = por %p72, %p73
      %p75 = scmp.ne.s32.totalorder %s61, %s62
      %p76 = scmp.eq.s32.totalorder %s28, 3
      %p77 = por %p75, %p76
      %p79 = scmp.ne.s32.totalorder %s62, %s78
      %p80 = scmp.eq.s32.totalorder %s28, 0
      %p81 = por %p79, %p80
      %s83 = sadd.s32 %s82, 1
      %p86 = scmp.eq.s32.totalorder %s22, 3
      %p87 = scmp.ne.s32.totalorder %s82, %s84
      %p88 = scmp.eq.s32.totalorder %s22, 0
      %p89 = por %p87, %p88
      %p90 = scmp.ne.s32.totalorder %s82, %s84
      %p91 = scmp.eq.s32.totalorder %s27, 3
      %p92 = por %p90, %p91
      %p93 = scmp.ne.s32.totalorder %s84, %s85
      %p94 = scmp.eq.s32.totalorder %s27, 0
      %p95 = por %p93, %p94
      %p96 = scmp.ne.s32.totalorder %s84, %s85
      %p97 = scmp.eq.s32.totalorder %s28, 3
      %p98 = por %p96, %p97
      %p100 = scmp.ne.s32.totalorder %s85, %s99
      %p101 = scmp.eq.s32.totalorder %s28, 0
      %p102 = por %p100, %p101
      %s104 = sadd.s32 %s103, 1
      %p107 = scmp.eq.s32.totalorder %s22, 3
      %p108 = scmp.ne.s32.totalorder %s103, %s105
      %p109 = scmp.eq.s32.totalorder %s22, 0
      %p110 = por %p108, %p109
      %p111 = scmp.ne.s32.totalorder %s103, %s105
      %p112 = scmp.eq.s32.totalorder %s27, 3
      %p113 = por %p111, %p112
      %p114 = scmp.ne.s32.totalorder %s105, %s106
      %p115 = scmp.eq.s32.totalorder %s27, 0
      %p116 = por %p114, %p115
      %p117 = scmp.ne.s32.totalorder %s105, %s106
      %p118 = scmp.eq.s32.totalorder %s28, 3
      %p119 = por %p117, %p118
      %p121 = scmp.ne.s32.totalorder %s106, %s120
      %p122 = scmp.eq.s32.totalorder %s28, 0
      %p123 = por %p121, %p122
      %s125 = sadd.s32 %s124, 1
      %p128 = scmp.eq.s32.totalorder %s22, 3
      %p129 = scmp.ne.s32.totalorder %s124, %s126
      %p130 = scmp.eq.s32.totalorder %s22, 0
      %p131 = por %p129, %p130
      %p132 = scmp.ne.s32.totalorder %s124, %s126
      %p133 = scmp.eq.s32.totalorder %s27, 3
      %p134 = por %p132, %p133
      %p135 = scmp.ne.s32.totalorder %s126, %s127
      %p136 = scmp.eq.s32.totalorder %s27, 0
      %p137 = por %p135, %p136
      %p138 = scmp.ne.s32.totalorder %s126, %s127
      %p139 = scmp.eq.s32.totalorder %s28, 3
      %p140 = por %p138, %p139
      %p142 = scmp.ne.s32.totalorder %s127, %s141
      %p143 = scmp.eq.s32.totalorder %s28, 0
      %p144 = por %p142, %p143
      %s146 = sadd.s32 %s145, 1
      %p149 = scmp.eq.s32.totalorder %s22, 3
      %p150 = scmp.ne.s32.totalorder %s145, %s147
      %p151 = scmp.eq.s32.totalorder %s22, 0
      %p152 = por %p150, %p151
      %p153 = scmp.ne.s32.totalorder %s145, %s147
      %p154 = scmp.eq.s32.totalorder %s27, 3
      %p155 = por %p153, %p154
      %p156 = scmp.ne.s32.totalorder %s147, %s148
      %p157 = scmp.eq.s32.totalorder %s27, 0
      %p158 = por %p156, %p157
      %p159 = scmp.ne.s32.totalorder %s147, %s148
      %p160 = scmp.eq.s32.totalorder %s28, 3
      %p161 = por %p159, %p160
      %p163 = scmp.ne.s32.totalorder %s148, %s162
      %p164 = scmp.eq.s32.totalorder %s28, 0
      %p165 = por %p163, %p164
      %s166 = ssub.s32 %s22, %s29
      %p167 = scmp.eq.s32.totalorder %s166, 0
      %s169 = sadd.s32 %s168, 1
      %s170 = scalar_select %p167, %s168, %s169
      %p173 = pneg %p167
      %p174 = scmp.eq.s32.totalorder %s22, 3
      %p175 = por %p173, %p174
      %p176 = scmp.ne.s32.totalorder %s168, %s171
      %p177 = scmp.eq.s32.totalorder %s22, 0
      %p178 = por %p176, %p177
      %p179 = scmp.ne.s32.totalorder %s168, %s171
      %p180 = scmp.eq.s32.totalorder %s27, 3
      %p181 = por %p179, %p180
      %p182 = scmp.ne.s32.totalorder %s171, %s172
      %p183 = scmp.eq.s32.totalorder %s27, 0
      %p184 = por %p182, %p183
      %p185 = scmp.ne.s32.totalorder %s171, %s172
      %p186 = scmp.eq.s32.totalorder %s28, 3
      %p187 = por %p185, %p186
      %p189 = scmp.ne.s32.totalorder %s172, %s188
      %p190 = scmp.eq.s32.totalorder %s28, 0
      %p191 = por %p189, %p190
      %p192 = scmp.le.s32.totalorder 1, %s22
      %p193 = scmp.lt.s32.totalorder %s22, 5
      %p194 = pnand %p192, %p193
      %p195 = pneg %p194
      // Predicated region
      $region9: #{tpu_custom_call.1} parent=5 // pred_check
        _
      $region10: #{tpu_custom_call.1} parent=5 // pred_check_branch
        %197 = sbr.rel (%p194) target = $region12
      $region11: #{tpu_custom_call.1} parent=5 // pred_region
        %s198 = ssub.s32 %s22, 1
        // Predicated region
        $region13: #{tpu_custom_call.1} parent=11 // pred_check
          %p199 = pneg %p95
        $region14: #{tpu_custom_call.1} parent=11 // pred_check_branch
          %201 = sbr.rel (%p199) target = $region16
        $region15: #{tpu_custom_call.1} parent=11 // pred_region
          %203 = vsyncadd [#allocation6], 0
          %s204 = sshll.u32 %s2, 4
          %s205 = int_to_ptr.hbm [resolvable:$true] %s204
          %s206 = sshll.u32 [#allocation7], 4
          %s207 = int_to_ptr.vmem [resolvable:$true] %s206
          %212 = dma.hbm_to_vmem [thread:$0]  %s205, 1024, %s207, [#allocation6], 128, 128, 8
        $region16: #{tpu_custom_call.1} parent=11 // pred_fallthru
          _
        // Predicated region
        $region17: #{tpu_custom_call.1} parent=11 // pred_check
          %p213 = pneg %p116
        $region18: #{tpu_custom_call.1} parent=11 // pred_check_branch
          %215 = sbr.rel (%p213) target = $region20
        $region19: #{tpu_custom_call.1} parent=11 // pred_region
          %217 = vsyncadd [#allocation9], 0
          %s218 = sshll.u32 %s3, 4
          %s219 = int_to_ptr.hbm [resolvable:$true] %s218
          %s220 = sshll.u32 [#allocation8], 4
          %s221 = int_to_ptr.vmem [resolvable:$true] %s220
          %226 = dma.hbm_to_vmem [thread:$0]  %s219, 1024, %s221, [#allocation9], 128, 128, 8
        $region20: #{tpu_custom_call.1} parent=11 // pred_fallthru
          _
        // Predicated region
        $region21: #{tpu_custom_call.1} parent=11 // pred_check
          %p227 = pneg %p137
        $region22: #{tpu_custom_call.1} parent=11 // pred_check_branch
          %229 = sbr.rel (%p227) target = $region24
        $region23: #{tpu_custom_call.1} parent=11 // pred_region
          _
        $region24: #{tpu_custom_call.1} parent=11 // pred_fallthru
          _
        // Predicated region
        $region25: #{tpu_custom_call.1} parent=11 // pred_check
          %p230 = pneg %p158
        $region26: #{tpu_custom_call.1} parent=11 // pred_check_branch
          %232 = sbr.rel (%p230) target = $region28
        $region27: #{tpu_custom_call.1} parent=11 // pred_region
          _
        $region28: #{tpu_custom_call.1} parent=11 // pred_fallthru
          _
      $region12: #{tpu_custom_call.1} parent=5 // pred_fallthru
        _
      %p233 = scmp.lt.s32.totalorder %s22, 4
      // Predicated region
      $region29: #{tpu_custom_call.1} parent=5 // pred_check
        %p234 = pneg %p233
      $region30: #{tpu_custom_call.1} parent=5 // pred_check_branch
        %236 = sbr.rel (%p234) target = $region32
      $region31: #{tpu_custom_call.1} parent=5 // pred_region
        // Predicated region
        $region33: #{tpu_custom_call.1} parent=31 // pred_check
          %p237 = pneg %p42
        $region34: #{tpu_custom_call.1} parent=31 // pred_check_branch
          %239 = sbr.rel (%p237) target = $region36
        $region35: #{tpu_custom_call.1} parent=31 // pred_region
          %s240 = sand.u32 %s32, 1
          %s241 = scalar_lea.sflag [#allocation3], %s240
          %s242 = sand.u32 %s32, 1
          %s243 = smul.addr %s242, 32
          %s244 = scalar_lea.vmem [#allocation2], %s243
          %s245 = smul.u32 4, %s22
          %247 = vsyncadd %s241, 0
          %s248 = smul.addr %s245, 2
          %s249 = smul.addr %s248, 8
          %s250 = scalar_lea.hbm %s0, %s249
          %s251 = sshll.u32 %s250, 4
          %s252 = int_to_ptr.hbm [resolvable:$true] %s251
          %s253 = sshll.u32 %s244, 4
          %s254 = int_to_ptr.vmem [resolvable:$true] %s253
          %259 = dma.hbm_to_vmem [thread:$0]  %s252, 512, %s254, %s241, 256, 128, 8
        $region36: #{tpu_custom_call.1} parent=31 // pred_fallthru
          _
        // Predicated region
        $region37: #{tpu_custom_call.1} parent=31 // pred_check
          %p260 = pneg %p68
        $region38: #{tpu_custom_call.1} parent=31 // pred_check_branch
          %262 = sbr.rel (%p260) target = $region40
        $region39: #{tpu_custom_call.1} parent=31 // pred_region
          %s263 = sand.u32 %s22, 1
          %s264 = scalar_lea.sflag [#allocation6], %s263
          %s265 = sand.u32 %s58, 1
          %s266 = smul.addr %s265, 32
          %s267 = scalar_lea.vmem [#allocation5], %s266
          %s268 = smul.u32 4, %s22
          %270 = vsyncadd %s264, 0
          %s271 = smul.addr %s268, 2
          %s272 = sadd.s32 1, %s271
          %s273 = smul.addr %s272, 8
          %s274 = scalar_lea.hbm %s1, %s273
          %s275 = sshll.u32 %s274, 4
          %s276 = int_to_ptr.hbm [resolvable:$true] %s275
          %s277 = sshll.u32 %s267, 4
          %s278 = int_to_ptr.vmem [resolvable:$true] %s277
          %283 = dma.hbm_to_vmem [thread:$0]  %s276, 512, %s278, %s264, 256, 128, 8
        $region40: #{tpu_custom_call.1} parent=31 // pred_fallthru
          _
      $region32: #{tpu_custom_call.1} parent=5 // pred_fallthru
        _
      %p284 = scmp.le.s32.totalorder 1, %s22
      %p285 = scmp.lt.s32.totalorder %s22, 5
      %p286 = pnand %p284, %p285
      %p287 = pneg %p286
      // Predicated region
      $region41: #{tpu_custom_call.1} parent=5 // pred_check
        _
      $region42: #{tpu_custom_call.1} parent=5 // pred_check_branch
        %289 = sbr.rel (%p286) target = $region44
      $region43: #{tpu_custom_call.1} parent=5 // pred_region
        %s290 = ssub.s32 %s22, 1
        %s291 = sand.u32 %s35, 1
        %s292 = scalar_lea.sflag [#allocation3], %s291
        %s293 = sand.u32 %s35, 1
        %s294 = smul.addr %s293, 32
        %s295 = scalar_lea.vmem [#allocation2], %s294
        // Predicated region
        $region45: #{tpu_custom_call.1} parent=43 // pred_check
          %p296 = pneg %p48
        $region46: #{tpu_custom_call.1} parent=43 // pred_check_branch
          %298 = sbr.rel (%p296) target = $region48
        $region47: #{tpu_custom_call.1} parent=43 // pred_region
          %300 = dma.done %s292, 512
        $region48: #{tpu_custom_call.1} parent=43 // pred_fallthru
          _
        %s301 = sand.u32 %s27, 1
        %s302 = scalar_lea.sflag [#allocation6], %s301
        %s303 = sand.u32 %s61, 1
        %s304 = smul.addr %s303, 32
        %s305 = scalar_lea.vmem [#allocation5], %s304
        // Predicated region
        $region49: #{tpu_custom_call.1} parent=43 // pred_check
          %p306 = pneg %p74
        $region50: #{tpu_custom_call.1} parent=43 // pred_check_branch
          %308 = sbr.rel (%p306) target = $region52
        $region51: #{tpu_custom_call.1} parent=43 // pred_region
          %310 = dma.done %s302, 512
        $region52: #{tpu_custom_call.1} parent=43 // pred_fallthru
          _
        // Predicated region
        $region53: #{tpu_custom_call.1} parent=43 // pred_check
          %p311 = pneg %p95
        $region54: #{tpu_custom_call.1} parent=43 // pred_check_branch
          %313 = sbr.rel (%p311) target = $region56
        $region55: #{tpu_custom_call.1} parent=43 // pred_region
          %315 = dma.done [#allocation6], 1024
        $region56: #{tpu_custom_call.1} parent=43 // pred_fallthru
          _
        // Predicated region
        $region57: #{tpu_custom_call.1} parent=43 // pred_check
          %p316 = pneg %p116
        $region58: #{tpu_custom_call.1} parent=43 // pred_check_branch
          %318 = sbr.rel (%p316) target = $region60
        $region59: #{tpu_custom_call.1} parent=43 // pred_region
          %320 = dma.done [#allocation9], 1024
        $region60: #{tpu_custom_call.1} parent=43 // pred_fallthru
          _
        %s321 = sand.u32 %s35, 1
        %s322 = scalar_lea.sflag [#allocation3], %s321
        %s323 = sand.u32 %s35, 1
        %s324 = smul.addr %s323, 32
        %s325 = scalar_lea.vmem [#allocation2], %s324
        %p326 = pneg %p48
        %p327 = pneg %p45
        %s328 = sand.u32 %s27, 1
        %s329 = scalar_lea.sflag [#allocation6], %s328
        %s330 = sand.u32 %s61, 1
        %s331 = smul.addr %s330, 32
        %s332 = scalar_lea.vmem [#allocation5], %s331
        %p333 = pneg %p74
        %p334 = pneg %p71
        %p335 = pneg %p95
        %p336 = pneg %p92
        %p337 = pneg %p116
        %p338 = pneg %p113
        %p339 = pneg %p137
        %p340 = pneg %p134
        %p341 = pneg %p158
        %p342 = pneg %p155
        %p343 = pneg %p184
        %p344 = pneg %p181
        %s345 = sand.u32 %s171, 1
        %s346 = scalar_lea.sflag [#allocation4], %s345
        %s347 = sand.u32 %s171, 1
        %s348 = smul.addr %s347, 32
        %s349 = scalar_lea.vmem [#allocation10], %s348
        %s350 = smul.u32 4, %s27
        %s351 = smul.u32 4, %s27
        %s352 = smul.u32 4, %s27
        %v353 = vld [vmem:[%s295] sm:$0xff]
        %v354 = vld [vmem:[%s295 + $0x8] sm:$0xff]
        %v355 = vld [vmem:[%s295 + $0x10] sm:$0xff]
        %v356 = vld [vmem:[%s295 + $0x18] sm:$0xff]
        %v357 = vld [vmem:[%s305] sm:$0xff]
        %v358 = vld [vmem:[%s305 + $0x8] sm:$0xff]
        %v359 = vld [vmem:[%s305 + $0x10] sm:$0xff]
        %v360 = vld [vmem:[%s305 + $0x18] sm:$0xff]
        %v361 = vld [vmem:[#allocation7] sm:$0xff]
        %v362 = vld [vmem:[#allocation7 + $0x8] sm:$0xff]
        %v363 = vld [vmem:[#allocation7 + $0x10] sm:$0xff]
        %v364 = vld [vmem:[#allocation7 + $0x18] sm:$0xff]
        %v365 = vld [vmem:[#allocation7 + $0x20] sm:$0xff]
        %v366 = vld [vmem:[#allocation7 + $0x28] sm:$0xff]
        %v367 = vld [vmem:[#allocation7 + $0x30] sm:$0xff]
        %v368 = vld [vmem:[#allocation7 + $0x38] sm:$0xff]
        %v369 = vld [vmem:[#allocation8] sm:$0xff]
        %v370 = vld [vmem:[#allocation8 + $0x8] sm:$0xff]
        %v371 = vld [vmem:[#allocation8 + $0x10] sm:$0xff]
        %v372 = vld [vmem:[#allocation8 + $0x18] sm:$0xff]
        %v373 = vld [vmem:[#allocation8 + $0x20] sm:$0xff]
        %v374 = vld [vmem:[#allocation8 + $0x28] sm:$0xff]
        %v375 = vld [vmem:[#allocation8 + $0x30] sm:$0xff]
        %v376 = vld [vmem:[#allocation8 + $0x38] sm:$0xff]
        %vm377 = vcmask 523264
        %v379 = vsel %vm377, %v357, 0
        %v382 = vsel %vm377, %v358, 0
        %v385 = vsel %vm377, %v359, 0
        %v388 = vsel %vm377, %v360, 0
        %390 = vmatpush.msra.mxu0 0.0
        %391 = vmatpush.msra.mxu0 0.0
        %392 = vmatpush.msra.mxu0 0.0
        %393 = vmatpush.msra.mxu0 0.0
        %394 = vmatpush.msra.mxu0 0.0
        %395 = vmatpush.msra.mxu0 0.0
        %396 = vmatpush.msra.mxu0 0.0
        %397 = vmatpush.msra.mxu0 0.0
        %398 = vmatpush.msra.mxu0 %v376
        %399 = vmatpush.msra.mxu0 %v375
        %400 = vmatpush.msra.mxu0 %v374
        %401 = vmatpush.msra.mxu0 %v373
        %402 = vmatpush.msra.mxu0 %v372
        %403 = vmatpush.msra.mxu0 %v371
        %404 = vmatpush.msra.mxu0 %v370
        %405 = vmatpush.msra.mxu0 %v369
        %406 = vmatmul.f32.gmra.mxu0 %v379
        %v407 = vpop.f32.mrf.mxu0
        %v408 = vadd.f32 0.0, %v407
        %409 = vmatmul.f32.gmra.mxu0 %v382
        %v410 = vpop.f32.mrf.mxu0
        %v411 = vadd.f32 0.0, %v410
        %412 = vmatmul.f32.gmra.mxu0 %v385
        %v413 = vpop.f32.mrf.mxu0
        %v414 = vadd.f32 0.0, %v413
        %415 = vmatmul.f32.gmra.mxu0 %v388
        %v416 = vpop.f32.mrf.mxu0
        %v417 = vadd.f32 0.0, %v416
        %418 = vdwg.mxu0
        %v420 = vsel %vm377, %v353, 0
        %v423 = vsel %vm377, %v354, 0
        %v426 = vsel %vm377, %v355, 0
        %v429 = vsel %vm377, %v356, 0
        %431 = vmatpush.msra.mxu0 0.0
        %432 = vmatpush.msra.mxu0 0.0
        %433 = vmatpush.msra.mxu0 0.0
        %434 = vmatpush.msra.mxu0 0.0
        %435 = vmatpush.msra.mxu0 0.0
        %436 = vmatpush.msra.mxu0 0.0
        %437 = vmatpush.msra.mxu0 0.0
        %438 = vmatpush.msra.mxu0 0.0
        %439 = vmatpush.msra.mxu0 %v368
        %440 = vmatpush.msra.mxu0 %v367
        %441 = vmatpush.msra.mxu0 %v366
        %442 = vmatpush.msra.mxu0 %v365
        %443 = vmatpush.msra.mxu0 %v364
        %444 = vmatpush.msra.mxu0 %v363
        %445 = vmatpush.msra.mxu0 %v362
        %446 = vmatpush.msra.mxu0 %v361
        %447 = vmatmul.f32.gmra.mxu0 %v420
        %v448 = vpop.f32.mrf.mxu0
        %v449 = vadd.f32 %v408, %v448
        %450 = vmatmul.f32.gmra.mxu0 %v423
        %v451 = vpop.f32.mrf.mxu0
        %v452 = vadd.f32 %v411, %v451
        %453 = vmatmul.f32.gmra.mxu0 %v426
        %v454 = vpop.f32.mrf.mxu0
        %v455 = vadd.f32 %v414, %v454
        %456 = vmatmul.f32.gmra.mxu0 %v429
        %v457 = vpop.f32.mrf.mxu0
        %v458 = vadd.f32 %v417, %v457
        %459 = vdwg.mxu0
        %v460 = vld [vmem:[%s4] sm:$0x1]
        %v461 = vld [vmem:[%s5] sm:$0x1]
        %v462 = vsel %vm377, %v449, 0.0
        %463 = vadd.xlane.f32.xlu0 %v462
        %v464 = vpop.xlane.xlu0 %463
        %v465 = vsel %vm377, %v452, 0.0
        %466 = vadd.xlane.f32.xlu0 %v465
        %v467 = vpop.xlane.xlu0 %466
        %v468 = vsel %vm377, %v455, 0.0
        %469 = vadd.xlane.f32.xlu0 %v468
        %v470 = vpop.xlane.xlu0 %469
        %v471 = vsel %vm377, %v458, 0.0
        %472 = vadd.xlane.f32.xlu0 %v471
        %v473 = vpop.xlane.xlu0 %472
        %v474 = vmul.f32 %v449, %v449
        %v475 = vmul.f32 %v452, %v452
        %v476 = vmul.f32 %v455, %v455
        %v477 = vmul.f32 %v458, %v458
        %v478 = vsel %vm377, %v474, 0.0
        %479 = vadd.xlane.f32.xlu0 %v478
        %v480 = vpop.xlane.xlu0 %479
        %v481 = vsel %vm377, %v475, 0.0
        %482 = vadd.xlane.f32.xlu0 %v481
        %v483 = vpop.xlane.xlu0 %482
        %v484 = vsel %vm377, %v476, 0.0
        %485 = vadd.xlane.f32.xlu0 %v484
        %v486 = vpop.xlane.xlu0 %485
        %v487 = vsel %vm377, %v477, 0.0
        %488 = vadd.xlane.f32.xlu0 %v487
        %v489 = vpop.xlane.xlu0 %488
        %v490 = vmul.f32 %v464, 0.015625
        %v491 = vmul.f32 %v467, 0.015625
        %v492 = vmul.f32 %v470, 0.015625
        %v493 = vmul.f32 %v473, 0.015625
        %v494 = vmul.f32 %v480, 0.015625
        %v495 = vmul.f32 %v483, 0.015625
        %v496 = vmul.f32 %v486, 0.015625
        %v497 = vmul.f32 %v489, 0.015625
        %v498 = vmul.f32 %v490, %v490
        %v499 = vmul.f32 %v491, %v491
        %v500 = vmul.f32 %v492, %v492
        %v501 = vmul.f32 %v493, %v493
        %v502 = vsub.f32 %v494, %v498
        %v503 = vsub.f32 %v495, %v499
        %v504 = vsub.f32 %v496, %v500
        %v505 = vsub.f32 %v497, %v501
        %v506 = vmax.f32 %v502, 0.0
        %v507 = vmax.f32 %v503, 0.0
        %v508 = vmax.f32 %v504, 0.0
        %v509 = vmax.f32 %v505, 0.0
        %v510 = vsub.f32 %v449, %v490
        %v511 = vsub.f32 %v452, %v491
        %v512 = vsub.f32 %v455, %v492
        %v513 = vsub.f32 %v458, %v493
        %v514 = vadd.f32 %v506, 1e-05
        %v515 = vadd.f32 %v507, 1e-05
        %v516 = vadd.f32 %v508, 1e-05
        %v517 = vadd.f32 %v509, 1e-05
        %v518 = vrsqrt.pop %v514
        %v519 = vmul.f32 %v518, %v514
        %v520 = vmul.f32 %v519, %v518
        %v521 = vmul.f32 0.5, %v520
        %v522 = vsub.f32 1.5, %v521
        %v523 = vmul.f32 %v518, %v522
        %vm524 = vweird.f32 %v514
        %vm525 = vweird.f32 %v518
        %vm526 = vmor %vm524, %vm525
        %v527 = vsel %vm526, %v518, %v523
        %v528 = vrsqrt.pop %v515
        %v529 = vmul.f32 %v528, %v515
        %v530 = vmul.f32 %v529, %v528
        %v531 = vmul.f32 0.5, %v530
        %v532 = vsub.f32 1.5, %v531
        %v533 = vmul.f32 %v528, %v532
        %vm534 = vweird.f32 %v515
        %vm535 = vweird.f32 %v528
        %vm536 = vmor %vm534, %vm535
        %v537 = vsel %vm536, %v528, %v533
        %v538 = vrsqrt.pop %v516
        %v539 = vmul.f32 %v538, %v516
        %v540 = vmul.f32 %v539, %v538
        %v541 = vmul.f32 0.5, %v540
        %v542 = vsub.f32 1.5, %v541
        %v543 = vmul.f32 %v538, %v542
        %vm544 = vweird.f32 %v516
        %vm545 = vweird.f32 %v538
        %vm546 = vmor %vm544, %vm545
        %v547 = vsel %vm546, %v538, %v543
        %v548 = vrsqrt.pop %v517
        %v549 = vmul.f32 %v548, %v517
        %v550 = vmul.f32 %v549, %v548
        %v551 = vmul.f32 0.5, %v550
        %v552 = vsub.f32 1.5, %v551
        %v553 = vmul.f32 %v548, %v552
        %vm554 = vweird.f32 %v517
        %vm555 = vweird.f32 %v548
        %vm556 = vmor %vm554, %vm555
        %v557 = vsel %vm556, %v548, %v553
        %v558 = vmul.f32 %v510, %v527
        %v559 = vmul.f32 %v511, %v537
        %v560 = vmul.f32 %v512, %v547
        %v561 = vmul.f32 %v513, %v557
        %v563 = vperm.slane %v460, 0
        %v565 = vmul.f32 %v558, %v563
        %v566 = vmul.f32 %v559, %v563
        %v567 = vmul.f32 %v560, %v563
        %v568 = vmul.f32 %v561, %v563
        %v570 = vperm.slane %v461, 0
        %v572 = vadd.f32 %v565, %v570
        %v573 = vadd.f32 %v566, %v570
        %v574 = vadd.f32 %v567, %v570
        %v575 = vadd.f32 %v568, %v570
        %576 = vst.msk [vmem:[%s349] sm:$0xff] %vm377, %v572
        %577 = vst.msk [vmem:[%s349 + $0x8] sm:$0xff] %vm377, %v573
        %578 = vst.msk [vmem:[%s349 + $0x10] sm:$0xff] %vm377, %v574
        %579 = vst.msk [vmem:[%s349 + $0x18] sm:$0xff] %vm377, %v575
        %s580 = sand.u32 %s171, 1
        %s581 = scalar_lea.sflag [#allocation4], %s580
        %s582 = sand.u32 %s171, 1
        %s583 = smul.addr %s582, 32
        %s584 = scalar_lea.vmem [#allocation10], %s583
        // Predicated region
        $region61: #{tpu_custom_call.1} parent=43 // pred_check
          %p585 = pneg %p181
        $region62: #{tpu_custom_call.1} parent=43 // pred_check_branch
          %587 = sbr.rel (%p585) target = $region64
        $region63: #{tpu_custom_call.1} parent=43 // pred_region
          %s588 = smul.u32 4, %s27
          %590 = vsyncadd %s581, 0
          %s591 = smul.addr %s588, 8
          %s592 = scalar_lea.hbm %s6, %s591
          %s593 = sshll.u32 %s584, 4
          %s594 = int_to_ptr.vmem [resolvable:$true] %s593
          %s595 = sshll.u32 %s592, 4
          %s596 = int_to_ptr.hbm [resolvable:$true] %s595
          %601 = dma.vmem_to_hbm [thread:$0]  %s594, 512, %s596, %s581, 128, 128, 8
        $region64: #{tpu_custom_call.1} parent=43 // pred_fallthru
          _
      $region44: #{tpu_custom_call.1} parent=5 // pred_fallthru
        _
      %p602 = scmp.le.s32.totalorder 2, %s22
      // Predicated region
      $region65: #{tpu_custom_call.1} parent=5 // pred_check
        %p603 = pneg %p602
      $region66: #{tpu_custom_call.1} parent=5 // pred_check_branch
        %605 = sbr.rel (%p603) target = $region68
      $region67: #{tpu_custom_call.1} parent=5 // pred_region
        %s606 = ssub.s32 %s22, 2
        // Predicated region
        $region69: #{tpu_custom_call.1} parent=67 // pred_check
          %p607 = pneg %p187
        $region70: #{tpu_custom_call.1} parent=67 // pred_check_branch
          %609 = sbr.rel (%p607) target = $region72
        $region71: #{tpu_custom_call.1} parent=67 // pred_region
          %s610 = sand.u32 %s172, 1
          %s611 = scalar_lea.sflag [#allocation4], %s610
          %s612 = sand.u32 %s172, 1
          %s613 = smul.addr %s612, 32
          %s614 = scalar_lea.vmem [#allocation10], %s613
          %616 = dma.done %s611, 512
        $region72: #{tpu_custom_call.1} parent=67 // pred_fallthru
          _
      $region68: #{tpu_custom_call.1} parent=5 // pred_fallthru
        _
    $region6: #{tpu_custom_call.1} parent=1 // loop_footer
      %s26 = sadd.s32 1, %s22
    $region7: #{tpu_custom_call.1} parent=1 // loop_footer_branch
      %21 = sbr.rel target = $region3
    $region8: #{tpu_custom_call.1} parent=1 // loop_exit
      _
    %617 = vsyncpa [#allocation3], 1
    %s618 = scalar_lea.sflag [#allocation3], 1
    %619 = vsyncpa %s618, 1
    %620 = vsyncpa [#allocation6], 1
    %s621 = scalar_lea.sflag [#allocation6], 1
    %622 = vsyncpa %s621, 1
    %623 = vsyncpa [#allocation9], 1
    %624 = vsyncpa [#allocation4], 1
    %s625 = scalar_lea.sflag [#allocation4], 1
    %626 = vsyncpa %s625, 1

</llo_original>
